<compile_context>
chip_gen: v7x
topology: tpu7x:2x2x1
jax: 0.10.0
libtpu: 0.0.40
codegen_flags: <defaults>
</compile_context>

<pallas_src>
import functools

import jax
import jax.numpy as jnp
from jax import lax
from jax.experimental import pallas as pl
from jax.experimental.pallas import tpu as pltpu


def lstm_caption_kernel(x_ref, wih_ref, whh_ref, b_ref, wfc_ref, bfc_ref,
                        out_ref, hs_scr, *, T, B):
    """Single-layer LSTM over all timesteps + hoisted fc projection.

    x_ref  : (T*B, E)    time-major flattened LSTM input
    wih_ref: (E, 4*Hp)   input->gates weights, gate-blockwise zero-padded (i,f,g,o)
    whh_ref: (Hp, 4*Hp)  hidden->gates weights, row- and gate-column zero-padded
    b_ref  : (1, 4*Hp)   combined bias (b_ih + b_hh), gate-blockwise zero-padded
    wfc_ref: (Hp, Vp)    fc weights, zero-padded rows/cols
    bfc_ref: (1, Vp)     fc bias, zero-padded cols
    out_ref: (T*B, Vp)   logits (lane-dense, single slab store)
    hs_scr : (T*B, Hp)   VMEM scratch holding all hidden states
    """
    Hp = whh_ref.shape[0]

    # --- hoisted input->gates matmul for ALL timesteps (bias folded in once) ---
    xg = (jnp.dot(x_ref[...], wih_ref[...], preferred_element_type=jnp.float32)
          + b_ref[...])                                        # (T*B, 4*Hp)

    # --- loop-invariant loads hoisted out of the recurrence ---
    w_hh = whh_ref[...]                                        # (Hp, 4*Hp)

    h = jnp.zeros((B, Hp), jnp.float32)
    c = jnp.zeros((B, Hp), jnp.float32)

    # Fully unrolled static loop: only h @ W_hh + gate math on the serial chain.
    for t in range(T):
        gates = xg[t * B:(t + 1) * B, :] + jnp.dot(
            h, w_hh, preferred_element_type=jnp.float32)       # (B, 4*Hp)
        # Lane-aligned gate slices (Hp == 128): free vreg selects.
        i_g = jax.nn.sigmoid(gates[:, 0 * Hp:1 * Hp])
        f_g = jax.nn.sigmoid(gates[:, 1 * Hp:2 * Hp])
        g_g = jnp.tanh(gates[:, 2 * Hp:3 * Hp])
        o_g = jax.nn.sigmoid(gates[:, 3 * Hp:4 * Hp])

        c = f_g * c + i_g * g_g
        h = o_g * jnp.tanh(c)
        hs_scr[t * B:(t + 1) * B, :] = h

    # --- hoisted fc projection: one big matmul + one lane-dense slab store ---
    logits = (jnp.dot(hs_scr[...], wfc_ref[...], preferred_element_type=jnp.float32)
              + bfc_ref[...])                                  # (T*B, Vp)
    out_ref[...] = logits.astype(out_ref.dtype)


def _round_up(x, m):
    return ((x + m - 1) // m) * m


def _pad_gate_cols(w, H, Hp):
    """(..., 4*H) -> (..., 4*Hp): each gate block padded to Hp lanes with zeros."""
    if Hp == H:
        return w
    parts = []
    for k in range(4):
        g = w[..., k * H:(k + 1) * H]
        pad = [(0, 0)] * (w.ndim - 1) + [(0, Hp - H)]
        parts.append(jnp.pad(g, pad))
    return jnp.concatenate(parts, axis=-1)


def caption_generator_forward(features, captions, params):
    """features: (B, E) float32; captions: (B, S) int32.

    Returns logits of shape (B, S+1, V) — same as the PyTorch module.
    """
    emb_table = params["embedding"]          # (V, E)
    w_ih = params["w_ih"]                    # (E, 4H)
    w_hh = params["w_hh"]                    # (H, 4H)
    b = params["b"]                          # (1, 4H)
    w_fc = params["w_fc"]                    # (H, V)
    b_fc = params["b_fc"]                    # (1, V)

    B, E = features.shape
    S = captions.shape[1]
    H = w_hh.shape[0]
    V = w_fc.shape[1]
    T = S + 1

    # Pad hidden and vocab dims to 128-lane multiples (zero padding keeps the
    # padded h/c lanes exactly zero through the recurrence, see kernel comment).
    Hp = _round_up(H, 128)
    Vp = _round_up(V, 128)

    w_ih_p = _pad_gate_cols(w_ih, H, Hp)                              # (E, 4*Hp)
    w_hh_p = _pad_gate_cols(jnp.pad(w_hh, ((0, Hp - H), (0, 0))), H, Hp)  # (Hp, 4*Hp)
    b_p = _pad_gate_cols(b, H, Hp)                                    # (1, 4*Hp)
    w_fc_p = jnp.pad(w_fc, ((0, Hp - H), (0, Vp - V)))                # (Hp, Vp)
    b_fc_p = jnp.pad(b_fc, ((0, 0), (0, Vp - V)))                     # (1, Vp)

    # Glue: embedding lookup + concat feature vector as the first timestep.
    embeddings = jnp.take(emb_table, captions, axis=0)                        # (B, S, E)
    lstm_input = jnp.concatenate([features[:, None, :], embeddings], axis=1)  # (B, T, E)
    x_tm = jnp.transpose(lstm_input, (1, 0, 2)).reshape(T * B, E)             # (T*B, E)
    x_tm = x_tm.astype(jnp.float32)

    kernel = functools.partial(lstm_caption_kernel, T=T, B=B)
    vmem = pl.BlockSpec(memory_space=pltpu.MemorySpace.VMEM)
    out_flat = pl.pallas_call(
        kernel,
        out_shape=jax.ShapeDtypeStruct((T * B, Vp), jnp.float32),
        in_specs=[vmem] * 6,
        out_specs=vmem,
        scratch_shapes=[
            pltpu.VMEM((T * B, Hp), jnp.float32),   # all hidden states
        ],
    )(x_tm, w_ih_p, w_hh_p, b_p, w_fc_p, b_fc_p)

    # (T*B, Vp) -> (B, T, V).  Cheap at these sizes; at realistic (T,B,V) the
    # consumer should be fused with this transpose or the kernel should emit
    # batch-major directly.
    out_tm = out_flat.reshape(T, B, Vp)
    return jnp.transpose(out_tm, (1, 0, 2))[:, :, :V]


def reference_forward(features, captions, params):
    """Pure-JAX reference mirroring torch.nn.LSTM + Linear semantics."""
    emb = jnp.take(params["embedding"], captions, axis=0)
    x = jnp.concatenate([features[:, None, :], emb], axis=1)     # (B, T, E)
    H = params["w_hh"].shape[0]
    B = x.shape[0]

    def step(carry, x_t):
        h, c = carry
        gates = x_t @ params["w_ih"] + h @ params["w_hh"] + params["b"]
        i_g = jax.nn.sigmoid(gates[:, 0 * H:1 * H])
        f_g = jax.nn.sigmoid(gates[:, 1 * H:2 * H])
        g_g = jnp.tanh(gates[:, 2 * H:3 * H])
        o_g = jax.nn.sigmoid(gates[:, 3 * H:4 * H])
        c = f_g * c + i_g * g_g
        h = o_g * jnp.tanh(c)
        return (h, c), h

    h0 = jnp.zeros((B, H), jnp.float32)
    c0 = jnp.zeros((B, H), jnp.float32)
    _, hs = lax.scan(step, (h0, c0), jnp.transpose(x, (1, 0, 2)))
    hs = jnp.transpose(hs, (1, 0, 2))                            # (B, T, H)
    return hs @ params["w_fc"] + params["b_fc"]


def init_params(key, vocab_size, embed_size, hidden_size):
    """Deterministic parameter init (uniform, PyTorch-like scale)."""
    ks = jax.random.split(key, 7)
    k = 1.0 / jnp.sqrt(hidden_size)
    return {
        "embedding": jax.random.normal(ks[0], (vocab_size, embed_size), jnp.float32),
        "w_ih": jax.random.uniform(ks[1], (embed_size, 4 * hidden_size), jnp.float32, -k, k),
        "w_hh": jax.random.uniform(ks[2], (hidden_size, 4 * hidden_size), jnp.float32, -k, k),
        # combined bias = b_ih + b_hh (PyTorch keeps them separate; sum is equivalent)
        "b": (jax.random.uniform(ks[3], (1, 4 * hidden_size), jnp.float32, -k, k)
              + jax.random.uniform(ks[4], (1, 4 * hidden_size), jnp.float32, -k, k)),
        "w_fc": jax.random.uniform(ks[5], (hidden_size, vocab_size), jnp.float32, -k, k),
        "b_fc": jax.random.uniform(ks[6], (1, vocab_size), jnp.float32, -k, k),
    }


if __name__ == "__main__":
    # Small shapes consistent with the module's forward:
    # batch=2, caption length=7 (-> 8 timesteps with the feature prepended),
    # embed=32, hidden=64, vocab=88.
    vocab_size, embed_size, hidden_size = 88, 32, 64
    batch, seq_len = 2, 7

    key = jax.random.PRNGKey(0)
    k_param, k_feat, k_cap = jax.random.split(key, 3)

    params = init_params(k_param, vocab_size, embed_size, hidden_size)
    features = jax.random.normal(k_feat, (batch, embed_size), jnp.float32)
    captions = jax.random.randint(k_cap, (batch, seq_len), 0, vocab_size, jnp.int32)

    out = caption_generator_forward(features, captions, params)
    out = jax.block_until_ready(out)

    ref = reference_forward(features, captions, params)
    assert out.shape == (batch, seq_len + 1, vocab_size), out.shape
    assert jnp.allclose(out, ref, atol=1e-4, rtol=1e-4), "mismatch vs JAX reference"

    print("KERNEL_OK")
</pallas_src>

<mosaic_0001>
module attributes {stable_mosaic.version = 11 : i64} {
  func.func @lstm_caption_kernel(%arg0: memref<16x32xf32, #tpu.memory_space<vmem>>, %arg1: memref<32x512xf32, #tpu.memory_space<vmem>>, %arg2: memref<128x512xf32, #tpu.memory_space<vmem>>, %arg3: memref<1x512xf32, #tpu.memory_space<vmem>>, %arg4: memref<128x128xf32, #tpu.memory_space<vmem>>, %arg5: memref<1x128xf32, #tpu.memory_space<vmem>>, %arg6: memref<16x128xf32, #tpu.memory_space<vmem>>, %arg7: memref<16x128xf32, #tpu.memory_space<vmem>>) attributes {dimension_semantics = [], scalar_prefetch = 0 : i64, scratch_operands = 1 : i64, tpu.core_type = #tpu.core_type<tc>} {
    %c0 = arith.constant 0 : index
    %c0_0 = arith.constant 0 : index
    %0 = vector.load %arg0[%c0, %c0_0] : memref<16x32xf32, #tpu.memory_space<vmem>>, vector<16x32xf32>
    %c0_1 = arith.constant 0 : index
    %c0_2 = arith.constant 0 : index
    %1 = vector.load %arg1[%c0_1, %c0_2] : memref<32x512xf32, #tpu.memory_space<vmem>>, vector<32x512xf32>
    %cst = arith.constant dense<0.000000e+00> : vector<16x512xf32>
    %2 = tpu.matmul %0, %1, %cst {dimension_numbers = #tpu.dot_dimension_numbers<[1], [0], [0], [1], [0, 0, 1, 1], [], []>} : vector<16x32xf32>, vector<32x512xf32>, vector<16x512xf32> -> vector<16x512xf32>
    %c0_3 = arith.constant 0 : index
    %c0_4 = arith.constant 0 : index
    %3 = vector.load %arg3[%c0_3, %c0_4] : memref<1x512xf32, #tpu.memory_space<vmem>>, vector<1x512xf32>
    %4 = vector.broadcast %3 : vector<1x512xf32> to vector<16x512xf32>
    %5 = arith.addf %2, %4 : vector<16x512xf32>
    %c0_5 = arith.constant 0 : index
    %c0_6 = arith.constant 0 : index
    %6 = vector.load %arg2[%c0_5, %c0_6] : memref<128x512xf32, #tpu.memory_space<vmem>>, vector<128x512xf32>
    %cst_7 = arith.constant 0.000000e+00 : f32
    %7 = vector.broadcast %cst_7 : f32 to vector<2x128xf32>
    %cst_8 = arith.constant 0.000000e+00 : f32
    %8 = vector.broadcast %cst_8 : f32 to vector<2x128xf32>
    %9 = vector.extract_strided_slice %5 {offsets = [0, 0], sizes = [2, 512], strides = [1, 1]} : vector<16x512xf32> to vector<2x512xf32>
    %cst_9 = arith.constant dense<0.000000e+00> : vector<2x512xf32>
    %10 = tpu.matmul %7, %6, %cst_9 {dimension_numbers = #tpu.dot_dimension_numbers<[1], [0], [0], [1], [0, 0, 1, 1], [], []>} : vector<2x128xf32>, vector<128x512xf32>, vector<2x512xf32> -> vector<2x512xf32>
    %11 = arith.addf %9, %10 : vector<2x512xf32>
    %12 = vector.extract_strided_slice %11 {offsets = [0, 0], sizes = [2, 128], strides = [1, 1]} : vector<2x512xf32> to vector<2x128xf32>
    %13 = arith.negf %12 : vector<2x128xf32>
    %14 = math.exp %13 : vector<2x128xf32>
    %cst_10 = arith.constant 1.000000e+00 : f32
    %15 = vector.broadcast %cst_10 : f32 to vector<2x128xf32>
    %16 = arith.addf %15, %14 : vector<2x128xf32>
    %17 = arith.divf %15, %16 : vector<2x128xf32>
    %18 = vector.extract_strided_slice %11 {offsets = [0, 128], sizes = [2, 128], strides = [1, 1]} : vector<2x512xf32> to vector<2x128xf32>
    %19 = arith.negf %18 : vector<2x128xf32>
    %20 = math.exp %19 : vector<2x128xf32>
    %cst_11 = arith.constant 1.000000e+00 : f32
    %21 = vector.broadcast %cst_11 : f32 to vector<2x128xf32>
    %22 = arith.addf %21, %20 : vector<2x128xf32>
    %23 = arith.divf %21, %22 : vector<2x128xf32>
    %24 = vector.extract_strided_slice %11 {offsets = [0, 256], sizes = [2, 128], strides = [1, 1]} : vector<2x512xf32> to vector<2x128xf32>
    %25 = math.tanh %24 : vector<2x128xf32>
    %26 = vector.extract_strided_slice %11 {offsets = [0, 384], sizes = [2, 128], strides = [1, 1]} : vector<2x512xf32> to vector<2x128xf32>
    %27 = arith.negf %26 : vector<2x128xf32>
    %28 = math.exp %27 : vector<2x128xf32>
    %cst_12 = arith.constant 1.000000e+00 : f32
    %29 = vector.broadcast %cst_12 : f32 to vector<2x128xf32>
    %30 = arith.addf %29, %28 : vector<2x128xf32>
    %31 = arith.divf %29, %30 : vector<2x128xf32>
    %32 = arith.mulf %23, %8 : vector<2x128xf32>
    %33 = arith.mulf %17, %25 : vector<2x128xf32>
    %34 = arith.addf %32, %33 : vector<2x128xf32>
    %35 = math.tanh %34 : vector<2x128xf32>
    %36 = arith.mulf %31, %35 : vector<2x128xf32>
    %c0_13 = arith.constant 0 : index
    %c0_14 = arith.constant 0 : index
    %37 = vector.load %arg7[%c0_13, %c0_14] : memref<16x128xf32, #tpu.memory_space<vmem>>, vector<2x128xf32>
    tpu.vector_store %arg7[%c0_13, %c0_14], %36 {strides = array<i32>} : memref<16x128xf32, #tpu.memory_space<vmem>>, vector<2x128xf32>,
    %38 = vector.extract_strided_slice %5 {offsets = [2, 0], sizes = [2, 512], strides = [1, 1]} : vector<16x512xf32> to vector<2x512xf32>
    %cst_15 = arith.constant dense<0.000000e+00> : vector<2x512xf32>
    %39 = tpu.matmul %36, %6, %cst_15 {dimension_numbers = #tpu.dot_dimension_numbers<[1], [0], [0], [1], [0, 0, 1, 1], [], []>} : vector<2x128xf32>, vector<128x512xf32>, vector<2x512xf32> -> vector<2x512xf32>
    %40 = arith.addf %38, %39 : vector<2x512xf32>
    %41 = vector.extract_strided_slice %40 {offsets = [0, 0], sizes = [2, 128], strides = [1, 1]} : vector<2x512xf32> to vector<2x128xf32>
    %42 = arith.negf %41 : vector<2x128xf32>
    %43 = math.exp %42 : vector<2x128xf32>
    %cst_16 = arith.constant 1.000000e+00 : f32
    %44 = vector.broadcast %cst_16 : f32 to vector<2x128xf32>
    %45 = arith.addf %44, %43 : vector<2x128xf32>
    %46 = arith.divf %44, %45 : vector<2x128xf32>
    %47 = vector.extract_strided_slice %40 {offsets = [0, 128], sizes = [2, 128], strides = [1, 1]} : vector<2x512xf32> to vector<2x128xf32>
    %48 = arith.negf %47 : vector<2x128xf32>
    %49 = math.exp %48 : vector<2x128xf32>
    %cst_17 = arith.constant 1.000000e+00 : f32
    %50 = vector.broadcast %cst_17 : f32 to vector<2x128xf32>
    %51 = arith.addf %50, %49 : vector<2x128xf32>
    %52 = arith.divf %50, %51 : vector<2x128xf32>
    %53 = vector.extract_strided_slice %40 {offsets = [0, 256], sizes = [2, 128], strides = [1, 1]} : vector<2x512xf32> to vector<2x128xf32>
    %54 = math.tanh %53 : vector<2x128xf32>
    %55 = vector.extract_strided_slice %40 {offsets = [0, 384], sizes = [2, 128], strides = [1, 1]} : vector<2x512xf32> to vector<2x128xf32>
    %56 = arith.negf %55 : vector<2x128xf32>
    %57 = math.exp %56 : vector<2x128xf32>
    %cst_18 = arith.constant 1.000000e+00 : f32
    %58 = vector.broadcast %cst_18 : f32 to vector<2x128xf32>
    %59 = arith.addf %58, %57 : vector<2x128xf32>
    %60 = arith.divf %58, %59 : vector<2x128xf32>
    %61 = arith.mulf %52, %34 : vector<2x128xf32>
    %62 = arith.mulf %46, %54 : vector<2x128xf32>
    %63 = arith.addf %61, %62 : vector<2x128xf32>
    %64 = math.tanh %63 : vector<2x128xf32>
    %65 = arith.mulf %60, %64 : vector<2x128xf32>
    %c2 = arith.constant 2 : index
    %c0_19 = arith.constant 0 : index
    %66 = vector.load %arg7[%c2, %c0_19] : memref<16x128xf32, #tpu.memory_space<vmem>>, vector<2x128xf32>
    tpu.vector_store %arg7[%c2, %c0_19], %65 {strides = array<i32>} : memref<16x128xf32, #tpu.memory_space<vmem>>, vector<2x128xf32>,
    %67 = vector.extract_strided_slice %5 {offsets = [4, 0], sizes = [2, 512], strides = [1, 1]} : vector<16x512xf32> to vector<2x512xf32>
    %cst_20 = arith.constant dense<0.000000e+00> : vector<2x512xf32>
    %68 = tpu.matmul %65, %6, %cst_20 {dimension_numbers = #tpu.dot_dimension_numbers<[1], [0], [0], [1], [0, 0, 1, 1], [], []>} : vector<2x128xf32>, vector<128x512xf32>, vector<2x512xf32> -> vector<2x512xf32>
    %69 = arith.addf %67, %68 : vector<2x512xf32>
    %70 = vector.extract_strided_slice %69 {offsets = [0, 0], sizes = [2, 128], strides = [1, 1]} : vector<2x512xf32> to vector<2x128xf32>
    %71 = arith.negf %70 : vector<2x128xf32>
    %72 = math.exp %71 : vector<2x128xf32>
    %cst_21 = arith.constant 1.000000e+00 : f32
    %73 = vector.broadcast %cst_21 : f32 to vector<2x128xf32>
    %74 = arith.addf %73, %72 : vector<2x128xf32>
    %75 = arith.divf %73, %74 : vector<2x128xf32>
    %76 = vector.extract_strided_slice %69 {offsets = [0, 128], sizes = [2, 128], strides = [1, 1]} : vector<2x512xf32> to vector<2x128xf32>
    %77 = arith.negf %76 : vector<2x128xf32>
    %78 = math.exp %77 : vector<2x128xf32>
    %cst_22 = arith.constant 1.000000e+00 : f32
    %79 = vector.broadcast %cst_22 : f32 to vector<2x128xf32>
    %80 = arith.addf %79, %78 : vector<2x128xf32>
    %81 = arith.divf %79, %80 : vector<2x128xf32>
    %82 = vector.extract_strided_slice %69 {offsets = [0, 256], sizes = [2, 128], strides = [1, 1]} : vector<2x512xf32> to vector<2x128xf32>
    %83 = math.tanh %82 : vector<2x128xf32>
    %84 = vector.extract_strided_slice %69 {offsets = [0, 384], sizes = [2, 128], strides = [1, 1]} : vector<2x512xf32> to vector<2x128xf32>
    %85 = arith.negf %84 : vector<2x128xf32>
    %86 = math.exp %85 : vector<2x128xf32>
    %cst_23 = arith.constant 1.000000e+00 : f32
    %87 = vector.broadcast %cst_23 : f32 to vector<2x128xf32>
    %88 = arith.addf %87, %86 : vector<2x128xf32>
    %89 = arith.divf %87, %88 : vector<2x128xf32>
    %90 = arith.mulf %81, %63 : vector<2x128xf32>
    %91 = arith.mulf %75, %83 : vector<2x128xf32>
    %92 = arith.addf %90, %91 : vector<2x128xf32>
    %93 = math.tanh %92 : vector<2x128xf32>
    %94 = arith.mulf %89, %93 : vector<2x128xf32>
    %c4 = arith.constant 4 : index
    %c0_24 = arith.constant 0 : index
    %95 = vector.load %arg7[%c4, %c0_24] : memref<16x128xf32, #tpu.memory_space<vmem>>, vector<2x128xf32>
    tpu.vector_store %arg7[%c4, %c0_24], %94 {strides = array<i32>} : memref<16x128xf32, #tpu.memory_space<vmem>>, vector<2x128xf32>,
    %96 = vector.extract_strided_slice %5 {offsets = [6, 0], sizes = [2, 512], strides = [1, 1]} : vector<16x512xf32> to vector<2x512xf32>
    %cst_25 = arith.constant dense<0.000000e+00> : vector<2x512xf32>
    %97 = tpu.matmul %94, %6, %cst_25 {dimension_numbers = #tpu.dot_dimension_numbers<[1], [0], [0], [1], [0, 0, 1, 1], [], []>} : vector<2x128xf32>, vector<128x512xf32>, vector<2x512xf32> -> vector<2x512xf32>
    %98 = arith.addf %96, %97 : vector<2x512xf32>
    %99 = vector.extract_strided_slice %98 {offsets = [0, 0], sizes = [2, 128], strides = [1, 1]} : vector<2x512xf32> to vector<2x128xf32>
    %100 = arith.negf %99 : vector<2x128xf32>
    %101 = math.exp %100 : vector<2x128xf32>
    %cst_26 = arith.constant 1.000000e+00 : f32
    %102 = vector.broadcast %cst_26 : f32 to vector<2x128xf32>
    %103 = arith.addf %102, %101 : vector<2x128xf32>
    %104 = arith.divf %102, %103 : vector<2x128xf32>
    %105 = vector.extract_strided_slice %98 {offsets = [0, 128], sizes = [2, 128], strides = [1, 1]} : vector<2x512xf32> to vector<2x128xf32>
    %106 = arith.negf %105 : vector<2x128xf32>
    %107 = math.exp %106 : vector<2x128xf32>
    %cst_27 = arith.constant 1.000000e+00 : f32
    %108 = vector.broadcast %cst_27 : f32 to vector<2x128xf32>
    %109 = arith.addf %108, %107 : vector<2x128xf32>
    %110 = arith.divf %108, %109 : vector<2x128xf32>
    %111 = vector.extract_strided_slice %98 {offsets = [0, 256], sizes = [2, 128], strides = [1, 1]} : vector<2x512xf32> to vector<2x128xf32>
    %112 = math.tanh %111 : vector<2x128xf32>
    %113 = vector.extract_strided_slice %98 {offsets = [0, 384], sizes = [2, 128], strides = [1, 1]} : vector<2x512xf32> to vector<2x128xf32>
    %114 = arith.negf %113 : vector<2x128xf32>
    %115 = math.exp %114 : vector<2x128xf32>
    %cst_28 = arith.constant 1.000000e+00 : f32
    %116 = vector.broadcast %cst_28 : f32 to vector<2x128xf32>
    %117 = arith.addf %116, %115 : vector<2x128xf32>
    %118 = arith.divf %116, %117 : vector<2x128xf32>
    %119 = arith.mulf %110, %92 : vector<2x128xf32>
    %120 = arith.mulf %104, %112 : vector<2x128xf32>
    %121 = arith.addf %119, %120 : vector<2x128xf32>
    %122 = math.tanh %121 : vector<2x128xf32>
    %123 = arith.mulf %118, %122 : vector<2x128xf32>
    %c6 = arith.constant 6 : index
    %c0_29 = arith.constant 0 : index
    %124 = vector.load %arg7[%c6, %c0_29] : memref<16x128xf32, #tpu.memory_space<vmem>>, vector<2x128xf32>
    tpu.vector_store %arg7[%c6, %c0_29], %123 {strides = array<i32>} : memref<16x128xf32, #tpu.memory_space<vmem>>, vector<2x128xf32>,
    %125 = vector.extract_strided_slice %5 {offsets = [8, 0], sizes = [2, 512], strides = [1, 1]} : vector<16x512xf32> to vector<2x512xf32>
    %cst_30 = arith.constant dense<0.000000e+00> : vector<2x512xf32>
    %126 = tpu.matmul %123, %6, %cst_30 {dimension_numbers = #tpu.dot_dimension_numbers<[1], [0], [0], [1], [0, 0, 1, 1], [], []>} : vector<2x128xf32>, vector<128x512xf32>, vector<2x512xf32> -> vector<2x512xf32>
    %127 = arith.addf %125, %126 : vector<2x512xf32>
    %128 = vector.extract_strided_slice %127 {offsets = [0, 0], sizes = [2, 128], strides = [1, 1]} : vector<2x512xf32> to vector<2x128xf32>
    %129 = arith.negf %128 : vector<2x128xf32>
    %130 = math.exp %129 : vector<2x128xf32>
    %cst_31 = arith.constant 1.000000e+00 : f32
    %131 = vector.broadcast %cst_31 : f32 to vector<2x128xf32>
    %132 = arith.addf %131, %130 : vector<2x128xf32>
    %133 = arith.divf %131, %132 : vector<2x128xf32>
    %134 = vector.extract_strided_slice %127 {offsets = [0, 128], sizes = [2, 128], strides = [1, 1]} : vector<2x512xf32> to vector<2x128xf32>
    %135 = arith.negf %134 : vector<2x128xf32>
    %136 = math.exp %135 : vector<2x128xf32>
    %cst_32 = arith.constant 1.000000e+00 : f32
    %137 = vector.broadcast %cst_32 : f32 to vector<2x128xf32>
    %138 = arith.addf %137, %136 : vector<2x128xf32>
    %139 = arith.divf %137, %138 : vector<2x128xf32>
    %140 = vector.extract_strided_slice %127 {offsets = [0, 256], sizes = [2, 128], strides = [1, 1]} : vector<2x512xf32> to vector<2x128xf32>
    %141 = math.tanh %140 : vector<2x128xf32>
    %142 = vector.extract_strided_slice %127 {offsets = [0, 384], sizes = [2, 128], strides = [1, 1]} : vector<2x512xf32> to vector<2x128xf32>
    %143 = arith.negf %142 : vector<2x128xf32>
    %144 = math.exp %143 : vector<2x128xf32>
    %cst_33 = arith.constant 1.000000e+00 : f32
    %145 = vector.broadcast %cst_33 : f32 to vector<2x128xf32>
    %146 = arith.addf %145, %144 : vector<2x128xf32>
    %147 = arith.divf %145, %146 : vector<2x128xf32>
    %148 = arith.mulf %139, %121 : vector<2x128xf32>
    %149 = arith.mulf %133, %141 : vector<2x128xf32>
    %150 = arith.addf %148, %149 : vector<2x128xf32>
    %151 = math.tanh %150 : vector<2x128xf32>
    %152 = arith.mulf %147, %151 : vector<2x128xf32>
    %c8 = arith.constant 8 : index
    %c0_34 = arith.constant 0 : index
    %153 = vector.load %arg7[%c8, %c0_34] : memref<16x128xf32, #tpu.memory_space<vmem>>, vector<2x128xf32>
    tpu.vector_store %arg7[%c8, %c0_34], %152 {strides = array<i32>} : memref<16x128xf32, #tpu.memory_space<vmem>>, vector<2x128xf32>,
    %154 = vector.extract_strided_slice %5 {offsets = [10, 0], sizes = [2, 512], strides = [1, 1]} : vector<16x512xf32> to vector<2x512xf32>
    %cst_35 = arith.constant dense<0.000000e+00> : vector<2x512xf32>
    %155 = tpu.matmul %152, %6, %cst_35 {dimension_numbers = #tpu.dot_dimension_numbers<[1], [0], [0], [1], [0, 0, 1, 1], [], []>} : vector<2x128xf32>, vector<128x512xf32>, vector<2x512xf32> -> vector<2x512xf32>
    %156 = arith.addf %154, %155 : vector<2x512xf32>
    %157 = vector.extract_strided_slice %156 {offsets = [0, 0], sizes = [2, 128], strides = [1, 1]} : vector<2x512xf32> to vector<2x128xf32>
    %158 = arith.negf %157 : vector<2x128xf32>
    %159 = math.exp %158 : vector<2x128xf32>
    %cst_36 = arith.constant 1.000000e+00 : f32
    %160 = vector.broadcast %cst_36 : f32 to vector<2x128xf32>
    %161 = arith.addf %160, %159 : vector<2x128xf32>
    %162 = arith.divf %160, %161 : vector<2x128xf32>
    %163 = vector.extract_strided_slice %156 {offsets = [0, 128], sizes = [2, 128], strides = [1, 1]} : vector<2x512xf32> to vector<2x128xf32>
    %164 = arith.negf %163 : vector<2x128xf32>
    %165 = math.exp %164 : vector<2x128xf32>
    %cst_37 = arith.constant 1.000000e+00 : f32
    %166 = vector.broadcast %cst_37 : f32 to vector<2x128xf32>
    %167 = arith.addf %166, %165 : vector<2x128xf32>
    %168 = arith.divf %166, %167 : vector<2x128xf32>
    %169 = vector.extract_strided_slice %156 {offsets = [0, 256], sizes = [2, 128], strides = [1, 1]} : vector<2x512xf32> to vector<2x128xf32>
    %170 = math.tanh %169 : vector<2x128xf32>
    %171 = vector.extract_strided_slice %156 {offsets = [0, 384], sizes = [2, 128], strides = [1, 1]} : vector<2x512xf32> to vector<2x128xf32>
    %172 = arith.negf %171 : vector<2x128xf32>
    %173 = math.exp %172 : vector<2x128xf32>
    %cst_38 = arith.constant 1.000000e+00 : f32
    %174 = vector.broadcast %cst_38 : f32 to vector<2x128xf32>
    %175 = arith.addf %174, %173 : vector<2x128xf32>
    %176 = arith.divf %174, %175 : vector<2x128xf32>
    %177 = arith.mulf %168, %150 : vector<2x128xf32>
    %178 = arith.mulf %162, %170 : vector<2x128xf32>
    %179 = arith.addf %177, %178 : vector<2x128xf32>
    %180 = math.tanh %179 : vector<2x128xf32>
    %181 = arith.mulf %176, %180 : vector<2x128xf32>
    %c10 = arith.constant 10 : index
    %c0_39 = arith.constant 0 : index
    %182 = vector.load %arg7[%c10, %c0_39] : memref<16x128xf32, #tpu.memory_space<vmem>>, vector<2x128xf32>
    tpu.vector_store %arg7[%c10, %c0_39], %181 {strides = array<i32>} : memref<16x128xf32, #tpu.memory_space<vmem>>, vector<2x128xf32>,
    %183 = vector.extract_strided_slice %5 {offsets = [12, 0], sizes = [2, 512], strides = [1, 1]} : vector<16x512xf32> to vector<2x512xf32>
    %cst_40 = arith.constant dense<0.000000e+00> : vector<2x512xf32>
    %184 = tpu.matmul %181, %6, %cst_40 {dimension_numbers = #tpu.dot_dimension_numbers<[1], [0], [0], [1], [0, 0, 1, 1], [], []>} : vector<2x128xf32>, vector<128x512xf32>, vector<2x512xf32> -> vector<2x512xf32>
    %185 = arith.addf %183, %184 : vector<2x512xf32>
    %186 = vector.extract_strided_slice %185 {offsets = [0, 0], sizes = [2, 128], strides = [1, 1]} : vector<2x512xf32> to vector<2x128xf32>
    %187 = arith.negf %186 : vector<2x128xf32>
    %188 = math.exp %187 : vector<2x128xf32>
    %cst_41 = arith.constant 1.000000e+00 : f32
    %189 = vector.broadcast %cst_41 : f32 to vector<2x128xf32>
    %190 = arith.addf %189, %188 : vector<2x128xf32>
    %191 = arith.divf %189, %190 : vector<2x128xf32>
    %192 = vector.extract_strided_slice %185 {offsets = [0, 128], sizes = [2, 128], strides = [1, 1]} : vector<2x512xf32> to vector<2x128xf32>
    %193 = arith.negf %192 : vector<2x128xf32>
    %194 = math.exp %193 : vector<2x128xf32>
    %cst_42 = arith.constant 1.000000e+00 : f32
    %195 = vector.broadcast %cst_42 : f32 to vector<2x128xf32>
    %196 = arith.addf %195, %194 : vector<2x128xf32>
    %197 = arith.divf %195, %196 : vector<2x128xf32>
    %198 = vector.extract_strided_slice %185 {offsets = [0, 256], sizes = [2, 128], strides = [1, 1]} : vector<2x512xf32> to vector<2x128xf32>
    %199 = math.tanh %198 : vector<2x128xf32>
    %200 = vector.extract_strided_slice %185 {offsets = [0, 384], sizes = [2, 128], strides = [1, 1]} : vector<2x512xf32> to vector<2x128xf32>
    %201 = arith.negf %200 : vector<2x128xf32>
    %202 = math.exp %201 : vector<2x128xf32>
    %cst_43 = arith.constant 1.000000e+00 : f32
    %203 = vector.broadcast %cst_43 : f32 to vector<2x128xf32>
    %204 = arith.addf %203, %202 : vector<2x128xf32>
    %205 = arith.divf %203, %204 : vector<2x128xf32>
    %206 = arith.mulf %197, %179 : vector<2x128xf32>
    %207 = arith.mulf %191, %199 : vector<2x128xf32>
    %208 = arith.addf %206, %207 : vector<2x128xf32>
    %209 = math.tanh %208 : vector<2x128xf32>
    %210 = arith.mulf %205, %209 : vector<2x128xf32>
    %c12 = arith.constant 12 : index
    %c0_44 = arith.constant 0 : index
    %211 = vector.load %arg7[%c12, %c0_44] : memref<16x128xf32, #tpu.memory_space<vmem>>, vector<2x128xf32>
    tpu.vector_store %arg7[%c12, %c0_44], %210 {strides = array<i32>} : memref<16x128xf32, #tpu.memory_space<vmem>>, vector<2x128xf32>,
    %212 = vector.extract_strided_slice %5 {offsets = [14, 0], sizes = [2, 512], strides = [1, 1]} : vector<16x512xf32> to vector<2x512xf32>
    %cst_45 = arith.constant dense<0.000000e+00> : vector<2x512xf32>
    %213 = tpu.matmul %210, %6, %cst_45 {dimension_numbers = #tpu.dot_dimension_numbers<[1], [0], [0], [1], [0, 0, 1, 1], [], []>} : vector<2x128xf32>, vector<128x512xf32>, vector<2x512xf32> -> vector<2x512xf32>
    %214 = arith.addf %212, %213 : vector<2x512xf32>
    %215 = vector.extract_strided_slice %214 {offsets = [0, 0], sizes = [2, 128], strides = [1, 1]} : vector<2x512xf32> to vector<2x128xf32>
    %216 = arith.negf %215 : vector<2x128xf32>
    %217 = math.exp %216 : vector<2x128xf32>
    %cst_46 = arith.constant 1.000000e+00 : f32
    %218 = vector.broadcast %cst_46 : f32 to vector<2x128xf32>
    %219 = arith.addf %218, %217 : vector<2x128xf32>
    %220 = arith.divf %218, %219 : vector<2x128xf32>
    %221 = vector.extract_strided_slice %214 {offsets = [0, 128], sizes = [2, 128], strides = [1, 1]} : vector<2x512xf32> to vector<2x128xf32>
    %222 = arith.negf %221 : vector<2x128xf32>
    %223 = math.exp %222 : vector<2x128xf32>
    %cst_47 = arith.constant 1.000000e+00 : f32
    %224 = vector.broadcast %cst_47 : f32 to vector<2x128xf32>
    %225 = arith.addf %224, %223 : vector<2x128xf32>
    %226 = arith.divf %224, %225 : vector<2x128xf32>
    %227 = vector.extract_strided_slice %214 {offsets = [0, 256], sizes = [2, 128], strides = [1, 1]} : vector<2x512xf32> to vector<2x128xf32>
    %228 = math.tanh %227 : vector<2x128xf32>
    %229 = vector.extract_strided_slice %214 {offsets = [0, 384], sizes = [2, 128], strides = [1, 1]} : vector<2x512xf32> to vector<2x128xf32>
    %230 = arith.negf %229 : vector<2x128xf32>
    %231 = math.exp %230 : vector<2x128xf32>
    %cst_48 = arith.constant 1.000000e+00 : f32
    %232 = vector.broadcast %cst_48 : f32 to vector<2x128xf32>
    %233 = arith.addf %232, %231 : vector<2x128xf32>
    %234 = arith.divf %232, %233 : vector<2x128xf32>
    %235 = arith.mulf %226, %208 : vector<2x128xf32>
    %236 = arith.mulf %220, %228 : vector<2x128xf32>
    %237 = arith.addf %235, %236 : vector<2x128xf32>
    %238 = math.tanh %237 : vector<2x128xf32>
    %239 = arith.mulf %234, %238 : vector<2x128xf32>
    %c14 = arith.constant 14 : index
    %c0_49 = arith.constant 0 : index
    %240 = vector.load %arg7[%c14, %c0_49] : memref<16x128xf32, #tpu.memory_space<vmem>>, vector<2x128xf32>
    tpu.vector_store %arg7[%c14, %c0_49], %239 {strides = array<i32>} : memref<16x128xf32, #tpu.memory_space<vmem>>, vector<2x128xf32>,
    %c0_50 = arith.constant 0 : index
    %c0_51 = arith.constant 0 : index
    %241 = vector.load %arg7[%c0_50, %c0_51] : memref<16x128xf32, #tpu.memory_space<vmem>>, vector<16x128xf32>
    %c0_52 = arith.constant 0 : index
    %c0_53 = arith.constant 0 : index
    %242 = vector.load %arg4[%c0_52, %c0_53] : memref<128x128xf32, #tpu.memory_space<vmem>>, vector<128x128xf32>
    %cst_54 = arith.constant dense<0.000000e+00> : vector<16x128xf32>
    %243 = tpu.matmul %241, %242, %cst_54 {dimension_numbers = #tpu.dot_dimension_numbers<[1], [0], [0], [1], [0, 0, 1, 1], [], []>} : vector<16x128xf32>, vector<128x128xf32>, vector<16x128xf32> -> vector<16x128xf32>
    %c0_55 = arith.constant 0 : index
    %c0_56 = arith.constant 0 : index
    %244 = vector.load %arg5[%c0_55, %c0_56] : memref<1x128xf32, #tpu.memory_space<vmem>>, vector<1x128xf32>
    %245 = vector.broadcast %244 : vector<1x128xf32> to vector<16x128xf32>
    %246 = arith.addf %243, %245 : vector<16x128xf32>
    %c0_57 = arith.constant 0 : index
    %c0_58 = arith.constant 0 : index
    %247 = vector.load %arg6[%c0_57, %c0_58] : memref<16x128xf32, #tpu.memory_space<vmem>>, vector<16x128xf32>
    tpu.vector_store %arg6[%c0_57, %c0_58], %246 {strides = array<i32>} : memref<16x128xf32, #tpu.memory_space<vmem>>, vector<16x128xf32>,
    return
  }
}

</mosaic_0001>

<llo_original>
// kernel: tpu_custom_call.1
$region0: #{tpu_custom_call.1}
  #allocation0 [shape = 'u32[]', space=smem, size = 0x4, offset = 0x4, fixed_abs, tag = 'smem constant byte address 0x4 - core index']
  #allocation1 [shape = 'u32[144,128]{1,0:T(1,128)}', space=vmem, size = 0x12000, scoped, tag = 'internal scratch']
  #allocation2 [shape = 'f32[16,128]{1,0:T(8,128)}', space=vmem, size = 0x2000, scoped, tag = 'scratch operand']
  %s0 = inlined_call_operand.hbm [shape: f32[16,32], index: 0, kind: input, shape index: {}]
  %s1 = inlined_call_operand.hbm [shape: f32[32,512], index: 1, kind: input, shape index: {}]
  %s2 = inlined_call_operand.hbm [shape: f32[128,512], index: 2, kind: input, shape index: {}]
  %s3 = inlined_call_operand.vmem [shape: f32[1,512], index: 3, kind: input, shape index: {}]
  %s4 = inlined_call_operand.hbm [shape: f32[128,128], index: 4, kind: input, shape index: {}]
  %s5 = inlined_call_operand.vmem [shape: f32[1,128], index: 5, kind: input, shape index: {}]
  %s6 = inlined_call_operand.hbm [shape: f32[16,128], index: 6, kind: output, shape index: {}]
  %s7 = sld [smem:[#allocation0]]
  $region50: #{tpu_custom_call.1} parent=0
    _
  %s9 = ssub.s32 1, %s7
  %s10 = scalar_select 0, %s9, %s7
  $region1: #{tpu_custom_call.1} parent=0
    #allocation3 [shape = 'u8[8192]{0}', space=vmem, size = 0x2000, scoped, tag = 'input window, operand 0, single buffered']
    #allocation4 [shape = 's32[1]{0}', space=sflag, size = 0x4, scoped, tag = 'scoped memory for tpu_custom_call.1']
    #allocation5 [shape = 's32[1]{0}', space=sflag, size = 0x4, scoped, tag = 'scoped memory for tpu_custom_call.1']
    #allocation6 [shape = 'u8[65536]{0}', space=vmem, size = 0x10000, scoped, tag = 'input window, operand 1, single buffered']
    #allocation7 [shape = 's32[1]{0}', space=sflag, size = 0x4, scoped, tag = 'scoped memory for tpu_custom_call.1']
    #allocation8 [shape = 'u8[262144]{0}', space=vmem, size = 0x40000, scoped, tag = 'input window, operand 2, single buffered']
    #allocation9 [shape = 'u8[65536]{0}', space=vmem, size = 0x10000, scoped, tag = 'input window, operand 4, single buffered']
    #allocation10 [shape = 's32[1]{0}', space=sflag, size = 0x4, scoped, tag = 'scoped memory for tpu_custom_call.1']
    #allocation11 [shape = 'u8[8192]{0}', space=vmem, size = 0x2000, scoped, tag = 'output window, operand 0, single buffered']
    %11 = vsyncpa [#allocation4], 0
    %12 = vsyncpa [#allocation7], 0
    %13 = vsyncpa [#allocation10], 0
    %14 = vsyncpa [#allocation5], 0
    // Predicated region
    $region2: #{tpu_custom_call.1} parent=1 // pred_check
      _
    $region3: #{tpu_custom_call.1} parent=1 // pred_check_branch
      %16 = sbr.rel (0) target = $region5
    $region4: #{tpu_custom_call.1} parent=1 // pred_region
      %s18 = ssub.s32 256, 256
      %19 = vsyncadd [#allocation4], %s18
      %s20 = sshll.u32 [#allocation3], 4
      %s21 = int_to_ptr.vmem [resolvable:$true] %s20
      %26 = dma.hbm_to_vmem [thread:$0]  %s0, 256, %s21, [#allocation4], 128, 128, 8
    $region5: #{tpu_custom_call.1} parent=1 // pred_fallthru
      _
    // Predicated region
    $region6: #{tpu_custom_call.1} parent=1 // pred_check
      _
    $region7: #{tpu_custom_call.1} parent=1 // pred_check_branch
      %28 = sbr.rel (0) target = $region9
    $region8: #{tpu_custom_call.1} parent=1 // pred_region
      %s30 = ssub.s32 2048, 2048
      %31 = vsyncadd [#allocation7], %s30
      %s32 = sshll.u32 [#allocation6], 4
      %s33 = int_to_ptr.vmem [resolvable:$true] %s32
      %38 = dma.hbm_to_vmem [thread:$0]  %s1, 2048, %s33, [#allocation7], 512, 512, 32
    $region9: #{tpu_custom_call.1} parent=1 // pred_fallthru
      _
    // Predicated region
    $region10: #{tpu_custom_call.1} parent=1 // pred_check
      _
    $region11: #{tpu_custom_call.1} parent=1 // pred_check_branch
      %40 = sbr.rel (0) target = $region13
    $region12: #{tpu_custom_call.1} parent=1 // pred_region
      %s42 = ssub.s32 8192, 8192
      %43 = vsyncadd [#allocation7], %s42
      %s44 = sshll.u32 [#allocation8], 4
      %s45 = int_to_ptr.vmem [resolvable:$true] %s44
      %50 = dma.hbm_to_vmem [thread:$0]  %s2, 8192, %s45, [#allocation7], 512, 512, 32
    $region13: #{tpu_custom_call.1} parent=1 // pred_fallthru
      _
    // Predicated region
    $region14: #{tpu_custom_call.1} parent=1 // pred_check
      _
    $region15: #{tpu_custom_call.1} parent=1 // pred_check_branch
      %52 = sbr.rel (0) target = $region17
    $region16: #{tpu_custom_call.1} parent=1 // pred_region
      _
    $region17: #{tpu_custom_call.1} parent=1 // pred_fallthru
      _
    // Predicated region
    $region18: #{tpu_custom_call.1} parent=1 // pred_check
      _
    $region19: #{tpu_custom_call.1} parent=1 // pred_check_branch
      %54 = sbr.rel (0) target = $region21
    $region20: #{tpu_custom_call.1} parent=1 // pred_region
      %s56 = ssub.s32 2048, 2048
      %57 = vsyncadd [#allocation10], %s56
      %s58 = sshll.u32 [#allocation9], 4
      %s59 = int_to_ptr.vmem [resolvable:$true] %s58
      %64 = dma.hbm_to_vmem [thread:$0]  %s4, 2048, %s59, [#allocation10], 128, 128, 8
    $region21: #{tpu_custom_call.1} parent=1 // pred_fallthru
      _
    // Predicated region
    $region22: #{tpu_custom_call.1} parent=1 // pred_check
      _
    $region23: #{tpu_custom_call.1} parent=1 // pred_check_branch
      %66 = sbr.rel (0) target = $region25
    $region24: #{tpu_custom_call.1} parent=1 // pred_region
      _
    $region25: #{tpu_custom_call.1} parent=1 // pred_fallthru
      _
    // Predicated region
    $region26: #{tpu_custom_call.1} parent=1 // pred_check
      _
    $region27: #{tpu_custom_call.1} parent=1 // pred_check_branch
      %68 = sbr.rel (0) target = $region29
    $region28: #{tpu_custom_call.1} parent=1 // pred_region
      %69 = dma.done [#allocation4], 256
    $region29: #{tpu_custom_call.1} parent=1 // pred_fallthru
      _
    // Predicated region
    $region30: #{tpu_custom_call.1} parent=1 // pred_check
      _
    $region31: #{tpu_custom_call.1} parent=1 // pred_check_branch
      %71 = sbr.rel (0) target = $region33
    $region32: #{tpu_custom_call.1} parent=1 // pred_region
      %72 = dma.done [#allocation7], 2048
    $region33: #{tpu_custom_call.1} parent=1 // pred_fallthru
      _
    // Predicated region
    $region34: #{tpu_custom_call.1} parent=1 // pred_check
      _
    $region35: #{tpu_custom_call.1} parent=1 // pred_check_branch
      %74 = sbr.rel (0) target = $region37
    $region36: #{tpu_custom_call.1} parent=1 // pred_region
      %75 = dma.done [#allocation7], 8192
    $region37: #{tpu_custom_call.1} parent=1 // pred_fallthru
      _
    // Predicated region
    $region38: #{tpu_custom_call.1} parent=1 // pred_check
      _
    $region39: #{tpu_custom_call.1} parent=1 // pred_check_branch
      %77 = sbr.rel (0) target = $region41
    $region40: #{tpu_custom_call.1} parent=1 // pred_region
      %78 = dma.done [#allocation10], 2048
    $region41: #{tpu_custom_call.1} parent=1 // pred_fallthru
      _
    %v79 = vld [vmem:[#allocation3] sm:$0xff]
    %v80 = vld [vmem:[#allocation3 + $0x8] sm:$0xff]
    %v81 = vld [vmem:[#allocation6] sm:$0xff]
    %v82 = vld [vmem:[#allocation6 + $0x8] sm:$0xff]
    %v83 = vld [vmem:[#allocation6 + $0x10] sm:$0xff]
    %v84 = vld [vmem:[#allocation6 + $0x18] sm:$0xff]
    %v85 = vld [vmem:[#allocation6 + $0x20] sm:$0xff]
    %v86 = vld [vmem:[#allocation6 + $0x28] sm:$0xff]
    %v87 = vld [vmem:[#allocation6 + $0x30] sm:$0xff]
    %v88 = vld [vmem:[#allocation6 + $0x38] sm:$0xff]
    %v89 = vld [vmem:[#allocation6 + $0x40] sm:$0xff]
    %v90 = vld [vmem:[#allocation6 + $0x48] sm:$0xff]
    %v91 = vld [vmem:[#allocation6 + $0x50] sm:$0xff]
    %v92 = vld [vmem:[#allocation6 + $0x58] sm:$0xff]
    %v93 = vld [vmem:[#allocation6 + $0x60] sm:$0xff]
    %v94 = vld [vmem:[#allocation6 + $0x68] sm:$0xff]
    %v95 = vld [vmem:[#allocation6 + $0x70] sm:$0xff]
    %v96 = vld [vmem:[#allocation6 + $0x78] sm:$0xff]
    %v97 = vld [vmem:[%s3] sm:$0xf]
    %v99 = vlaneseq
    %v100 = vshrl.u32 %v99, 7
    %v101 = vsub.s32 0, %v100
    %v102 = vrot.slane %v97, %v101
    %v103 = vlaneseq
    %v104 = vshrl.u32 %v103, 7
    %v105 = vsub.s32 1, %v104
    %v106 = vrot.slane %v97, %v105
    %v107 = vlaneseq
    %v108 = vshrl.u32 %v107, 7
    %v109 = vsub.s32 2, %v108
    %v110 = vrot.slane %v97, %v109
    %v111 = vlaneseq
    %v112 = vshrl.u32 %v111, 7
    %v113 = vsub.s32 3, %v112
    %v114 = vrot.slane %v97, %v113
    %vm119 = vcmask 261120
    %v121 = vsel %vm119, %v79, 0
    %v124 = vsel %vm119, %v80, 0
    %126 = vmatprep.subr.mxu0 %v82
    %127 = vmatpush1.msra.mxu0 %v81
    %128 = vmatprep.subr.mxu0 %v86
    %129 = vmatpush1.msra.mxu0 %v85
    %130 = vmatprep.subr.mxu0 %v90
    %131 = vmatpush1.msra.mxu0 %v89
    %132 = vmatprep.subr.mxu0 %v94
    %133 = vmatpush1.msra.mxu0 %v93
    %134 = vmatprep.subr.mxu0 0.0
    %135 = vmatpush1.msra.mxu0 0.0
    %136 = vmatprep.subr.mxu0 0.0
    %137 = vmatpush1.msra.mxu0 0.0
    %138 = vmatprep.subr.mxu0 0.0
    %139 = vmatpush1.msra.mxu0 0.0
    %140 = vmatprep.subr.mxu0 0.0
    %141 = vmatpush1.msra.mxu0 0.0
    %142 = vmatprep.subr.mxu0 0.0
    %143 = vmatpush1.msra.mxu0 0.0
    %144 = vmatprep.subr.mxu0 0.0
    %145 = vmatpush1.msra.mxu0 0.0
    %146 = vmatprep.subr.mxu0 0.0
    %147 = vmatpush1.msra.mxu0 0.0
    %148 = vmatprep.subr.mxu0 0.0
    %149 = vmatpush1.msra.mxu0 0.0
    %150 = vmatprep.subr.mxu0 0.0
    %151 = vmatpush1.msra.mxu0 0.0
    %152 = vmatprep.subr.mxu0 0.0
    %153 = vmatpush1.msra.mxu0 0.0
    %154 = vmatprep.subr.mxu0 0.0
    %155 = vmatpush1.msra.mxu0 0.0
    %156 = vmatprep.subr.mxu0 0.0
    %157 = vmatpush1.msra.mxu0 0.0
    %158 = vmatprep.subr.mxu0 0.0
    %159 = vmatpush1.msra.mxu0 0.0
    %160 = vmatprep.subr.mxu0 0.0
    %161 = vmatpush1.msra.mxu0 0.0
    %162 = vmatprep.subr.mxu0 0.0
    %163 = vmatpush1.msra.mxu0 0.0
    %164 = vmatprep.subr.mxu0 0.0
    %165 = vmatpush1.msra.mxu0 0.0
    %166 = vmatprep.subr.mxu0 0.0
    %167 = vmatpush1.msra.mxu0 0.0
    %168 = vmatprep.subr.mxu0 0.0
    %169 = vmatpush1.msra.mxu0 0.0
    %170 = vmatprep.subr.mxu0 0.0
    %171 = vmatpush1.msra.mxu0 0.0
    %172 = vmatprep.subr.mxu0 0.0
    %173 = vmatpush1.msra.mxu0 0.0
    %174 = vmatprep.subr.mxu0 0.0
    %175 = vmatpush1.msra.mxu0 0.0
    %176 = vmatprep.subr.mxu0 0.0
    %177 = vmatpush1.msra.mxu0 0.0
    %178 = vmatprep.subr.mxu0 0.0
    %179 = vmatpush1.msra.mxu0 0.0
    %180 = vmatprep.subr.mxu0 0.0
    %181 = vmatpush1.msra.mxu0 0.0
    %182 = vmatprep.subr.mxu0 0.0
    %183 = vmatpush1.msra.mxu0 0.0
    %184 = vmatprep.subr.mxu0 0.0
    %185 = vmatpush1.msra.mxu0 0.0
    %186 = vmatprep.subr.mxu0 0.0
    %187 = vmatpush1.msra.mxu0 0.0
    %188 = vmatprep.subr.mxu0 0.0
    %189 = vmatpush1.msra.mxu0 0.0
    %190 = vmatprep.mubr.f32.mxu0 0.0
    %191 = vmatmul.mubr.f32.gmra.mrb[0].mxu0 %v121
    %v192 = vpop.f32.mrb[0].mxu0
    %v193 = vadd.f32 %v102, %v192
    %v194 = vpop.f32.mrb[0].mxu0
    %v195 = vadd.f32 %v106, %v194
    %196 = vmatprep.mubr.f32.mxu0 0.0
    %197 = vmatmul.mubr.f32.gmra.mrb[0].mxu0 %v124
    %v198 = vpop.f32.mrb[0].mxu0
    %v199 = vadd.f32 %v102, %v198
    %v200 = vpop.f32.mrb[0].mxu0
    %v201 = vadd.f32 %v106, %v200
    %202 = vdwg.mxu0
    %203 = vmatprep.subr.mxu0 %v84
    %204 = vmatpush1.msra.mxu0 %v83
    %205 = vmatprep.subr.mxu0 %v88
    %206 = vmatpush1.msra.mxu0 %v87
    %207 = vmatprep.subr.mxu0 %v92
    %208 = vmatpush1.msra.mxu0 %v91
    %209 = vmatprep.subr.mxu0 %v96
    %210 = vmatpush1.msra.mxu0 %v95
    %211 = vmatprep.subr.mxu0 0.0
    %212 = vmatpush1.msra.mxu0 0.0
    %213 = vmatprep.subr.mxu0 0.0
    %214 = vmatpush1.msra.mxu0 0.0
    %215 = vmatprep.subr.mxu0 0.0
    %216 = vmatpush1.msra.mxu0 0.0
    %217 = vmatprep.subr.mxu0 0.0
    %218 = vmatpush1.msra.mxu0 0.0
    %219 = vmatprep.subr.mxu0 0.0
    %220 = vmatpush1.msra.mxu0 0.0
    %221 = vmatprep.subr.mxu0 0.0
    %222 = vmatpush1.msra.mxu0 0.0
    %223 = vmatprep.subr.mxu0 0.0
    %224 = vmatpush1.msra.mxu0 0.0
    %225 = vmatprep.subr.mxu0 0.0
    %226 = vmatpush1.msra.mxu0 0.0
    %227 = vmatprep.subr.mxu0 0.0
    %228 = vmatpush1.msra.mxu0 0.0
    %229 = vmatprep.subr.mxu0 0.0
    %230 = vmatpush1.msra.mxu0 0.0
    %231 = vmatprep.subr.mxu0 0.0
    %232 = vmatpush1.msra.mxu0 0.0
    %233 = vmatprep.subr.mxu0 0.0
    %234 = vmatpush1.msra.mxu0 0.0
    %235 = vmatprep.subr.mxu0 0.0
    %236 = vmatpush1.msra.mxu0 0.0
    %237 = vmatprep.subr.mxu0 0.0
    %238 = vmatpush1.msra.mxu0 0.0
    %239 = vmatprep.subr.mxu0 0.0
    %240 = vmatpush1.msra.mxu0 0.0
    %241 = vmatprep.subr.mxu0 0.0
    %242 = vmatpush1.msra.mxu0 0.0
    %243 = vmatprep.subr.mxu0 0.0
    %244 = vmatpush1.msra.mxu0 0.0
    %245 = vmatprep.subr.mxu0 0.0
    %246 = vmatpush1.msra.mxu0 0.0
    %247 = vmatprep.subr.mxu0 0.0
    %248 = vmatpush1.msra.mxu0 0.0
    %249 = vmatprep.subr.mxu0 0.0
    %250 = vmatpush1.msra.mxu0 0.0
    %251 = vmatprep.subr.mxu0 0.0
    %252 = vmatpush1.msra.mxu0 0.0
    %253 = vmatprep.subr.mxu0 0.0
    %254 = vmatpush1.msra.mxu0 0.0
    %255 = vmatprep.subr.mxu0 0.0
    %256 = vmatpush1.msra.mxu0 0.0
    %257 = vmatprep.subr.mxu0 0.0
    %258 = vmatpush1.msra.mxu0 0.0
    %259 = vmatprep.subr.mxu0 0.0
    %260 = vmatpush1.msra.mxu0 0.0
    %261 = vmatprep.subr.mxu0 0.0
    %262 = vmatpush1.msra.mxu0 0.0
    %263 = vmatprep.subr.mxu0 0.0
    %264 = vmatpush1.msra.mxu0 0.0
    %265 = vmatprep.subr.mxu0 0.0
    %266 = vmatpush1.msra.mxu0 0.0
    %267 = vmatprep.mubr.f32.mxu0 0.0
    %268 = vmatmul.mubr.f32.gmra.mrb[0].mxu0 %v121
    %v269 = vpop.f32.mrb[0].mxu0
    %v270 = vadd.f32 %v110, %v269
    %v271 = vpop.f32.mrb[0].mxu0
    %v272 = vadd.f32 %v114, %v271
    %273 = vmatprep.mubr.f32.mxu0 0.0
    %274 = vmatmul.mubr.f32.gmra.mrb[0].mxu0 %v124
    %v275 = vpop.f32.mrb[0].mxu0
    %v276 = vadd.f32 %v110, %v275
    %v277 = vpop.f32.mrb[0].mxu0
    %v278 = vadd.f32 %v114, %v277
    %279 = vdwg.mxu0
    %v280 = vld [vmem:[#allocation8] sm:$0xff]
    %v281 = vld [vmem:[#allocation8 + $0x8] sm:$0xff]
    %v282 = vld [vmem:[#allocation8 + $0x10] sm:$0xff]
    %v283 = vld [vmem:[#allocation8 + $0x18] sm:$0xff]
    %v284 = vld [vmem:[#allocation8 + $0x20] sm:$0xff]
    %v285 = vld [vmem:[#allocation8 + $0x28] sm:$0xff]
    %v286 = vld [vmem:[#allocation8 + $0x30] sm:$0xff]
    %v287 = vld [vmem:[#allocation8 + $0x38] sm:$0xff]
    %v288 = vld [vmem:[#allocation8 + $0x40] sm:$0xff]
    %v289 = vld [vmem:[#allocation8 + $0x48] sm:$0xff]
    %v290 = vld [vmem:[#allocation8 + $0x50] sm:$0xff]
    %v291 = vld [vmem:[#allocation8 + $0x58] sm:$0xff]
    %v292 = vld [vmem:[#allocation8 + $0x60] sm:$0xff]
    %v293 = vld [vmem:[#allocation8 + $0x68] sm:$0xff]
    %v294 = vld [vmem:[#allocation8 + $0x70] sm:$0xff]
    %v295 = vld [vmem:[#allocation8 + $0x78] sm:$0xff]
    %v296 = vld [vmem:[#allocation8 + $0x80] sm:$0xff]
    %v297 = vld [vmem:[#allocation8 + $0x88] sm:$0xff]
    %v298 = vld [vmem:[#allocation8 + $0x90] sm:$0xff]
    %v299 = vld [vmem:[#allocation8 + $0x98] sm:$0xff]
    %v300 = vld [vmem:[#allocation8 + $0xa0] sm:$0xff]
    %v301 = vld [vmem:[#allocation8 + $0xa8] sm:$0xff]
    %v302 = vld [vmem:[#allocation8 + $0xb0] sm:$0xff]
    %v303 = vld [vmem:[#allocation8 + $0xb8] sm:$0xff]
    %v304 = vld [vmem:[#allocation8 + $0xc0] sm:$0xff]
    %v305 = vld [vmem:[#allocation8 + $0xc8] sm:$0xff]
    %v306 = vld [vmem:[#allocation8 + $0xd0] sm:$0xff]
    %v307 = vld [vmem:[#allocation8 + $0xd8] sm:$0xff]
    %v308 = vld [vmem:[#allocation8 + $0xe0] sm:$0xff]
    %v309 = vld [vmem:[#allocation8 + $0xe8] sm:$0xff]
    %v310 = vld [vmem:[#allocation8 + $0xf0] sm:$0xff]
    %v311 = vld [vmem:[#allocation8 + $0xf8] sm:$0xff]
    %v312 = vld [vmem:[#allocation8 + $0x100] sm:$0xff]
    %v313 = vld [vmem:[#allocation8 + $0x108] sm:$0xff]
    %v314 = vld [vmem:[#allocation8 + $0x110] sm:$0xff]
    %v315 = vld [vmem:[#allocation8 + $0x118] sm:$0xff]
    %v316 = vld [vmem:[#allocation8 + $0x120] sm:$0xff]
    %v317 = vld [vmem:[#allocation8 + $0x128] sm:$0xff]
    %v318 = vld [vmem:[#allocation8 + $0x130] sm:$0xff]
    %v319 = vld [vmem:[#allocation8 + $0x138] sm:$0xff]
    %v320 = vld [vmem:[#allocation8 + $0x140] sm:$0xff]
    %v321 = vld [vmem:[#allocation8 + $0x148] sm:$0xff]
    %v322 = vld [vmem:[#allocation8 + $0x150] sm:$0xff]
    %v323 = vld [vmem:[#allocation8 + $0x158] sm:$0xff]
    %v324 = vld [vmem:[#allocation8 + $0x160] sm:$0xff]
    %v325 = vld [vmem:[#allocation8 + $0x168] sm:$0xff]
    %v326 = vld [vmem:[#allocation8 + $0x170] sm:$0xff]
    %v327 = vld [vmem:[#allocation8 + $0x178] sm:$0xff]
    %v328 = vld [vmem:[#allocation8 + $0x180] sm:$0xff]
    %v329 = vld [vmem:[#allocation8 + $0x188] sm:$0xff]
    %v330 = vld [vmem:[#allocation8 + $0x190] sm:$0xff]
    %v331 = vld [vmem:[#allocation8 + $0x198] sm:$0xff]
    %v332 = vld [vmem:[#allocation8 + $0x1a0] sm:$0xff]
    %v333 = vld [vmem:[#allocation8 + $0x1a8] sm:$0xff]
    %v334 = vld [vmem:[#allocation8 + $0x1b0] sm:$0xff]
    %v335 = vld [vmem:[#allocation8 + $0x1b8] sm:$0xff]
    %v336 = vld [vmem:[#allocation8 + $0x1c0] sm:$0xff]
    %v337 = vld [vmem:[#allocation8 + $0x1c8] sm:$0xff]
    %v338 = vld [vmem:[#allocation8 + $0x1d0] sm:$0xff]
    %v339 = vld [vmem:[#allocation8 + $0x1d8] sm:$0xff]
    %v340 = vld [vmem:[#allocation8 + $0x1e0] sm:$0xff]
    %v341 = vld [vmem:[#allocation8 + $0x1e8] sm:$0xff]
    %v342 = vld [vmem:[#allocation8 + $0x1f0] sm:$0xff]
    %v343 = vld [vmem:[#allocation8 + $0x1f8] sm:$0xff]
    %344 = vmatprep.subr.mxu0 %v281
    %345 = vmatpush1.msra.mxu0 %v280
    %346 = vmatprep.subr.mxu0 %v285
    %347 = vmatpush1.msra.mxu0 %v284
    %348 = vmatprep.subr.mxu0 %v289
    %349 = vmatpush1.msra.mxu0 %v288
    %350 = vmatprep.subr.mxu0 %v293
    %351 = vmatpush1.msra.mxu0 %v292
    %352 = vmatprep.subr.mxu0 %v297
    %353 = vmatpush1.msra.mxu0 %v296
    %354 = vmatprep.subr.mxu0 %v301
    %355 = vmatpush1.msra.mxu0 %v300
    %356 = vmatprep.subr.mxu0 %v305
    %357 = vmatpush1.msra.mxu0 %v304
    %358 = vmatprep.subr.mxu0 %v309
    %359 = vmatpush1.msra.mxu0 %v308
    %360 = vmatprep.subr.mxu0 %v313
    %361 = vmatpush1.msra.mxu0 %v312
    %362 = vmatprep.subr.mxu0 %v317
    %363 = vmatpush1.msra.mxu0 %v316
    %364 = vmatprep.subr.mxu0 %v321
    %365 = vmatpush1.msra.mxu0 %v320
    %366 = vmatprep.subr.mxu0 %v325
    %367 = vmatpush1.msra.mxu0 %v324
    %368 = vmatprep.subr.mxu0 %v329
    %369 = vmatpush1.msra.mxu0 %v328
    %370 = vmatprep.subr.mxu0 %v333
    %371 = vmatpush1.msra.mxu0 %v332
    %372 = vmatprep.subr.mxu0 %v337
    %373 = vmatpush1.msra.mxu0 %v336
    %374 = vmatprep.subr.mxu0 %v341
    %375 = vmatpush1.msra.mxu0 %v340
    %376 = vmatprep.subr.mxu0 0.0
    %377 = vmatpush1.msra.mxu0 0.0
    %378 = vmatprep.subr.mxu0 0.0
    %379 = vmatpush1.msra.mxu0 0.0
    %380 = vmatprep.subr.mxu0 0.0
    %381 = vmatpush1.msra.mxu0 0.0
    %382 = vmatprep.subr.mxu0 0.0
    %383 = vmatpush1.msra.mxu0 0.0
    %384 = vmatprep.subr.mxu0 0.0
    %385 = vmatpush1.msra.mxu0 0.0
    %386 = vmatprep.subr.mxu0 0.0
    %387 = vmatpush1.msra.mxu0 0.0
    %388 = vmatprep.subr.mxu0 0.0
    %389 = vmatpush1.msra.mxu0 0.0
    %390 = vmatprep.subr.mxu0 0.0
    %391 = vmatpush1.msra.mxu0 0.0
    %392 = vmatprep.subr.mxu0 0.0
    %393 = vmatpush1.msra.mxu0 0.0
    %394 = vmatprep.subr.mxu0 0.0
    %395 = vmatpush1.msra.mxu0 0.0
    %396 = vmatprep.subr.mxu0 0.0
    %397 = vmatpush1.msra.mxu0 0.0
    %398 = vmatprep.subr.mxu0 0.0
    %399 = vmatpush1.msra.mxu0 0.0
    %400 = vmatprep.subr.mxu0 0.0
    %401 = vmatpush1.msra.mxu0 0.0
    %402 = vmatprep.subr.mxu0 0.0
    %403 = vmatpush1.msra.mxu0 0.0
    %404 = vmatprep.subr.mxu0 0.0
    %405 = vmatpush1.msra.mxu0 0.0
    %406 = vmatprep.subr.mxu0 0.0
    %407 = vmatpush1.msra.mxu0 0.0
    %408 = vmatprep.mubr.f32.mxu0 0.0
    %409 = vmatmul.mubr.f32.gmra.mrb[0].mxu0 0.0
    %v410 = vpop.f32.mrb[0].mxu0
    %v411 = vadd.f32 0.0, %v410
    %v412 = vpop.f32.mrb[0].mxu0
    %v413 = vadd.f32 0.0, %v412
    %414 = vdwg.mxu0
    %415 = vmatprep.subr.mxu0 %v283
    %416 = vmatpush1.msra.mxu0 %v282
    %417 = vmatprep.subr.mxu0 %v287
    %418 = vmatpush1.msra.mxu0 %v286
    %419 = vmatprep.subr.mxu0 %v291
    %420 = vmatpush1.msra.mxu0 %v290
    %421 = vmatprep.subr.mxu0 %v295
    %422 = vmatpush1.msra.mxu0 %v294
    %423 = vmatprep.subr.mxu0 %v299
    %424 = vmatpush1.msra.mxu0 %v298
    %425 = vmatprep.subr.mxu0 %v303
    %426 = vmatpush1.msra.mxu0 %v302
    %427 = vmatprep.subr.mxu0 %v307
    %428 = vmatpush1.msra.mxu0 %v306
    %429 = vmatprep.subr.mxu0 %v311
    %430 = vmatpush1.msra.mxu0 %v310
    %431 = vmatprep.subr.mxu0 %v315
    %432 = vmatpush1.msra.mxu0 %v314
    %433 = vmatprep.subr.mxu0 %v319
    %434 = vmatpush1.msra.mxu0 %v318
    %435 = vmatprep.subr.mxu0 %v323
    %436 = vmatpush1.msra.mxu0 %v322
    %437 = vmatprep.subr.mxu0 %v327
    %438 = vmatpush1.msra.mxu0 %v326
    %439 = vmatprep.subr.mxu0 %v331
    %440 = vmatpush1.msra.mxu0 %v330
    %441 = vmatprep.subr.mxu0 %v335
    %442 = vmatpush1.msra.mxu0 %v334
    %443 = vmatprep.subr.mxu0 %v339
    %444 = vmatpush1.msra.mxu0 %v338
    %445 = vmatprep.subr.mxu0 %v343
    %446 = vmatpush1.msra.mxu0 %v342
    %447 = vmatprep.subr.mxu0 0.0
    %448 = vmatpush1.msra.mxu0 0.0
    %449 = vmatprep.subr.mxu0 0.0
    %450 = vmatpush1.msra.mxu0 0.0
    %451 = vmatprep.subr.mxu0 0.0
    %452 = vmatpush1.msra.mxu0 0.0
    %453 = vmatprep.subr.mxu0 0.0
    %454 = vmatpush1.msra.mxu0 0.0
    %455 = vmatprep.subr.mxu0 0.0
    %456 = vmatpush1.msra.mxu0 0.0
    %457 = vmatprep.subr.mxu0 0.0
    %458 = vmatpush1.msra.mxu0 0.0
    %459 = vmatprep.subr.mxu0 0.0
    %460 = vmatpush1.msra.mxu0 0.0
    %461 = vmatprep.subr.mxu0 0.0
    %462 = vmatpush1.msra.mxu0 0.0
    %463 = vmatprep.subr.mxu0 0.0
    %464 = vmatpush1.msra.mxu0 0.0
    %465 = vmatprep.subr.mxu0 0.0
    %466 = vmatpush1.msra.mxu0 0.0
    %467 = vmatprep.subr.mxu0 0.0
    %468 = vmatpush1.msra.mxu0 0.0
    %469 = vmatprep.subr.mxu0 0.0
    %470 = vmatpush1.msra.mxu0 0.0
    %471 = vmatprep.subr.mxu0 0.0
    %472 = vmatpush1.msra.mxu0 0.0
    %473 = vmatprep.subr.mxu0 0.0
    %474 = vmatpush1.msra.mxu0 0.0
    %475 = vmatprep.subr.mxu0 0.0
    %476 = vmatpush1.msra.mxu0 0.0
    %477 = vmatprep.subr.mxu0 0.0
    %478 = vmatpush1.msra.mxu0 0.0
    %479 = vmatprep.mubr.f32.mxu0 0.0
    %480 = vmatmul.mubr.f32.gmra.mrb[0].mxu0 0.0
    %v481 = vpop.f32.mrb[0].mxu0
    %v482 = vadd.f32 0.0, %v481
    %v483 = vpop.f32.mrb[0].mxu0
    %v484 = vadd.f32 0.0, %v483
    %485 = vdwg.mxu0
    %v486 = vadd.f32 %v193, %v411
    %v487 = vadd.f32 %v195, %v413
    %v488 = vadd.f32 %v270, %v482
    %v489 = vadd.f32 %v272, %v484
    %v490 = vxor.u32 %v486, 2147483648
    %v491 = vmul.f32 %v490, 1.442695
    %v492 = vpow.pop %v491
    %v493 = vadd.f32 %v492, 1.0
    %v494 = vrcp.pop %v493
    %v495 = vmul.f32 1.0, %v494
    %v496 = vxor.u32 %v487, 2147483648
    %v497 = vmul.f32 %v496, 1.442695
    %v498 = vpow.pop %v497
    %v499 = vadd.f32 %v498, 1.0
    %v500 = vrcp.pop %v499
    %v501 = vmul.f32 1.0, %v500
    %v502 = vtanh.pop %v488
    %v503 = vxor.u32 %v489, 2147483648
    %v504 = vmul.f32 %v503, 1.442695
    %v505 = vpow.pop %v504
    %v506 = vadd.f32 %v505, 1.0
    %v507 = vrcp.pop %v506
    %v508 = vmul.f32 1.0, %v507
    %v509 = vmul.f32 %v501, 0.0
    %v510 = vmul.f32 %v495, %v502
    %v511 = vadd.f32 %v509, %v510
    %v512 = vtanh.pop %v511
    %v513 = vmul.f32 %v508, %v512
    %514 = vst [vmem:[#allocation2] sm:$0x3] %v513
    %515 = vmatprep.subr.mxu0 %v281
    %516 = vmatpush1.msra.mxu0 %v280
    %517 = vmatprep.subr.mxu0 %v285
    %518 = vmatpush1.msra.mxu0 %v284
    %519 = vmatprep.subr.mxu0 %v289
    %520 = vmatpush1.msra.mxu0 %v288
    %521 = vmatprep.subr.mxu0 %v293
    %522 = vmatpush1.msra.mxu0 %v292
    %523 = vmatprep.subr.mxu0 %v297
    %524 = vmatpush1.msra.mxu0 %v296
    %525 = vmatprep.subr.mxu0 %v301
    %526 = vmatpush1.msra.mxu0 %v300
    %527 = vmatprep.subr.mxu0 %v305
    %528 = vmatpush1.msra.mxu0 %v304
    %529 = vmatprep.subr.mxu0 %v309
    %530 = vmatpush1.msra.mxu0 %v308
    %531 = vmatprep.subr.mxu0 %v313
    %532 = vmatpush1.msra.mxu0 %v312
    %533 = vmatprep.subr.mxu0 %v317
    %534 = vmatpush1.msra.mxu0 %v316
    %535 = vmatprep.subr.mxu0 %v321
    %536 = vmatpush1.msra.mxu0 %v320
    %537 = vmatprep.subr.mxu0 %v325
    %538 = vmatpush1.msra.mxu0 %v324
    %539 = vmatprep.subr.mxu0 %v329
    %540 = vmatpush1.msra.mxu0 %v328
    %541 = vmatprep.subr.mxu0 %v333
    %542 = vmatpush1.msra.mxu0 %v332
    %543 = vmatprep.subr.mxu0 %v337
    %544 = vmatpush1.msra.mxu0 %v336
    %545 = vmatprep.subr.mxu0 %v341
    %546 = vmatpush1.msra.mxu0 %v340
    %547 = vmatprep.subr.mxu0 0.0
    %548 = vmatpush1.msra.mxu0 0.0
    %549 = vmatprep.subr.mxu0 0.0
    %550 = vmatpush1.msra.mxu0 0.0
    %551 = vmatprep.subr.mxu0 0.0
    %552 = vmatpush1.msra.mxu0 0.0
    %553 = vmatprep.subr.mxu0 0.0
    %554 = vmatpush1.msra.mxu0 0.0
    %555 = vmatprep.subr.mxu0 0.0
    %556 = vmatpush1.msra.mxu0 0.0
    %557 = vmatprep.subr.mxu0 0.0
    %558 = vmatpush1.msra.mxu0 0.0
    %559 = vmatprep.subr.mxu0 0.0
    %560 = vmatpush1.msra.mxu0 0.0
    %561 = vmatprep.subr.mxu0 0.0
    %562 = vmatpush1.msra.mxu0 0.0
    %563 = vmatprep.subr.mxu0 0.0
    %564 = vmatpush1.msra.mxu0 0.0
    %565 = vmatprep.subr.mxu0 0.0
    %566 = vmatpush1.msra.mxu0 0.0
    %567 = vmatprep.subr.mxu0 0.0
    %568 = vmatpush1.msra.mxu0 0.0
    %569 = vmatprep.subr.mxu0 0.0
    %570 = vmatpush1.msra.mxu0 0.0
    %571 = vmatprep.subr.mxu0 0.0
    %572 = vmatpush1.msra.mxu0 0.0
    %573 = vmatprep.subr.mxu0 0.0
    %574 = vmatpush1.msra.mxu0 0.0
    %575 = vmatprep.subr.mxu0 0.0
    %576 = vmatpush1.msra.mxu0 0.0
    %577 = vmatprep.subr.mxu0 0.0
    %578 = vmatpush1.msra.mxu0 0.0
    %579 = vmatprep.mubr.f32.mxu0 0.0
    %580 = vmatmul.mubr.f32.gmra.mrb[0].mxu0 %v513
    %v581 = vpop.f32.mrb[0].mxu0
    %v582 = vadd.f32 0.0, %v581
    %v583 = vpop.f32.mrb[0].mxu0
    %v584 = vadd.f32 0.0, %v583
    %585 = vdwg.mxu0
    %586 = vmatprep.subr.mxu0 %v283
    %587 = vmatpush1.msra.mxu0 %v282
    %588 = vmatprep.subr.mxu0 %v287
    %589 = vmatpush1.msra.mxu0 %v286
    %590 = vmatprep.subr.mxu0 %v291
    %591 = vmatpush1.msra.mxu0 %v290
    %592 = vmatprep.subr.mxu0 %v295
    %593 = vmatpush1.msra.mxu0 %v294
    %594 = vmatprep.subr.mxu0 %v299
    %595 = vmatpush1.msra.mxu0 %v298
    %596 = vmatprep.subr.mxu0 %v303
    %597 = vmatpush1.msra.mxu0 %v302
    %598 = vmatprep.subr.mxu0 %v307
    %599 = vmatpush1.msra.mxu0 %v306
    %600 = vmatprep.subr.mxu0 %v311
    %601 = vmatpush1.msra.mxu0 %v310
    %602 = vmatprep.subr.mxu0 %v315
    %603 = vmatpush1.msra.mxu0 %v314
    %604 = vmatprep.subr.mxu0 %v319
    %605 = vmatpush1.msra.mxu0 %v318
    %606 = vmatprep.subr.mxu0 %v323
    %607 = vmatpush1.msra.mxu0 %v322
    %608 = vmatprep.subr.mxu0 %v327
    %609 = vmatpush1.msra.mxu0 %v326
    %610 = vmatprep.subr.mxu0 %v331
    %611 = vmatpush1.msra.mxu0 %v330
    %612 = vmatprep.subr.mxu0 %v335
    %613 = vmatpush1.msra.mxu0 %v334
    %614 = vmatprep.subr.mxu0 %v339
    %615 = vmatpush1.msra.mxu0 %v338
    %616 = vmatprep.subr.mxu0 %v343
    %617 = vmatpush1.msra.mxu0 %v342
    %618 = vmatprep.subr.mxu0 0.0
    %619 = vmatpush1.msra.mxu0 0.0
    %620 = vmatprep.subr.mxu0 0.0
    %621 = vmatpush1.msra.mxu0 0.0
    %622 = vmatprep.subr.mxu0 0.0
    %623 = vmatpush1.msra.mxu0 0.0
    %624 = vmatprep.subr.mxu0 0.0
    %625 = vmatpush1.msra.mxu0 0.0
    %626 = vmatprep.subr.mxu0 0.0
    %627 = vmatpush1.msra.mxu0 0.0
    %628 = vmatprep.subr.mxu0 0.0
    %629 = vmatpush1.msra.mxu0 0.0
    %630 = vmatprep.subr.mxu0 0.0
    %631 = vmatpush1.msra.mxu0 0.0
    %632 = vmatprep.subr.mxu0 0.0
    %633 = vmatpush1.msra.mxu0 0.0
    %634 = vmatprep.subr.mxu0 0.0
    %635 = vmatpush1.msra.mxu0 0.0
    %636 = vmatprep.subr.mxu0 0.0
    %637 = vmatpush1.msra.mxu0 0.0
    %638 = vmatprep.subr.mxu0 0.0
    %639 = vmatpush1.msra.mxu0 0.0
    %640 = vmatprep.subr.mxu0 0.0
    %641 = vmatpush1.msra.mxu0 0.0
    %642 = vmatprep.subr.mxu0 0.0
    %643 = vmatpush1.msra.mxu0 0.0
    %644 = vmatprep.subr.mxu0 0.0
    %645 = vmatpush1.msra.mxu0 0.0
    %646 = vmatprep.subr.mxu0 0.0
    %647 = vmatpush1.msra.mxu0 0.0
    %648 = vmatprep.subr.mxu0 0.0
    %649 = vmatpush1.msra.mxu0 0.0
    %650 = vmatprep.mubr.f32.mxu0 0.0
    %651 = vmatmul.mubr.f32.gmra.mrb[0].mxu0 %v513
    %v652 = vpop.f32.mrb[0].mxu0
    %v653 = vadd.f32 0.0, %v652
    %v654 = vpop.f32.mrb[0].mxu0
    %v655 = vadd.f32 0.0, %v654
    %656 = vdwg.mxu0
    %v661 = vrot.slane %v582, 6
    %v662 = vrot.slane %v584, 6
    %v663 = vrot.slane %v653, 6
    %v664 = vrot.slane %v655, 6
    %v669 = vadd.f32 %v193, %v661
    %v670 = vadd.f32 %v195, %v662
    %v671 = vadd.f32 %v270, %v663
    %v672 = vadd.f32 %v272, %v664
    %v673 = vxor.u32 %v669, 2147483648
    %v674 = vmul.f32 %v673, 1.442695
    %v675 = vpow.pop %v674
    %v676 = vadd.f32 %v675, 1.0
    %v677 = vrcp.pop %v676
    %v678 = vmul.f32 1.0, %v677
    %v679 = vxor.u32 %v670, 2147483648
    %v680 = vmul.f32 %v679, 1.442695
    %v681 = vpow.pop %v680
    %v682 = vadd.f32 %v681, 1.0
    %v683 = vrcp.pop %v682
    %v684 = vmul.f32 1.0, %v683
    %v685 = vtanh.pop %v671
    %v686 = vxor.u32 %v672, 2147483648
    %v687 = vmul.f32 %v686, 1.442695
    %v688 = vpow.pop %v687
    %v689 = vadd.f32 %v688, 1.0
    %v690 = vrcp.pop %v689
    %v691 = vmul.f32 1.0, %v690
    %v693 = vrot.slane %v511, 6
    %v695 = vmul.f32 %v684, %v693
    %v696 = vmul.f32 %v678, %v685
    %v697 = vadd.f32 %v695, %v696
    %v698 = vtanh.pop %v697
    %v699 = vmul.f32 %v691, %v698
    %700 = vst [vmem:[#allocation2] sm:$0xc] %v699
    %v702 = vrot.slane %v699, 2
    %704 = vmatprep.subr.mxu0 %v281
    %705 = vmatpush1.msra.mxu0 %v280
    %706 = vmatprep.subr.mxu0 %v285
    %707 = vmatpush1.msra.mxu0 %v284
    %708 = vmatprep.subr.mxu0 %v289
    %709 = vmatpush1.msra.mxu0 %v288
    %710 = vmatprep.subr.mxu0 %v293
    %711 = vmatpush1.msra.mxu0 %v292
    %712 = vmatprep.subr.mxu0 %v297
    %713 = vmatpush1.msra.mxu0 %v296
    %714 = vmatprep.subr.mxu0 %v301
    %715 = vmatpush1.msra.mxu0 %v300
    %716 = vmatprep.subr.mxu0 %v305
    %717 = vmatpush1.msra.mxu0 %v304
    %718 = vmatprep.subr.mxu0 %v309
    %719 = vmatpush1.msra.mxu0 %v308
    %720 = vmatprep.subr.mxu0 %v313
    %721 = vmatpush1.msra.mxu0 %v312
    %722 = vmatprep.subr.mxu0 %v317
    %723 = vmatpush1.msra.mxu0 %v316
    %724 = vmatprep.subr.mxu0 %v321
    %725 = vmatpush1.msra.mxu0 %v320
    %726 = vmatprep.subr.mxu0 %v325
    %727 = vmatpush1.msra.mxu0 %v324
    %728 = vmatprep.subr.mxu0 %v329
    %729 = vmatpush1.msra.mxu0 %v328
    %730 = vmatprep.subr.mxu0 %v333
    %731 = vmatpush1.msra.mxu0 %v332
    %732 = vmatprep.subr.mxu0 %v337
    %733 = vmatpush1.msra.mxu0 %v336
    %734 = vmatprep.subr.mxu0 %v341
    %735 = vmatpush1.msra.mxu0 %v340
    %736 = vmatprep.subr.mxu0 0.0
    %737 = vmatpush1.msra.mxu0 0.0
    %738 = vmatprep.subr.mxu0 0.0
    %739 = vmatpush1.msra.mxu0 0.0
    %740 = vmatprep.subr.mxu0 0.0
    %741 = vmatpush1.msra.mxu0 0.0
    %742 = vmatprep.subr.mxu0 0.0
    %743 = vmatpush1.msra.mxu0 0.0
    %744 = vmatprep.subr.mxu0 0.0
    %745 = vmatpush1.msra.mxu0 0.0
    %746 = vmatprep.subr.mxu0 0.0
    %747 = vmatpush1.msra.mxu0 0.0
    %748 = vmatprep.subr.mxu0 0.0
    %749 = vmatpush1.msra.mxu0 0.0
    %750 = vmatprep.subr.mxu0 0.0
    %751 = vmatpush1.msra.mxu0 0.0
    %752 = vmatprep.subr.mxu0 0.0
    %753 = vmatpush1.msra.mxu0 0.0
    %754 = vmatprep.subr.mxu0 0.0
    %755 = vmatpush1.msra.mxu0 0.0
    %756 = vmatprep.subr.mxu0 0.0
    %757 = vmatpush1.msra.mxu0 0.0
    %758 = vmatprep.subr.mxu0 0.0
    %759 = vmatpush1.msra.mxu0 0.0
    %760 = vmatprep.subr.mxu0 0.0
    %761 = vmatpush1.msra.mxu0 0.0
    %762 = vmatprep.subr.mxu0 0.0
    %763 = vmatpush1.msra.mxu0 0.0
    %764 = vmatprep.subr.mxu0 0.0
    %765 = vmatpush1.msra.mxu0 0.0
    %766 = vmatprep.subr.mxu0 0.0
    %767 = vmatpush1.msra.mxu0 0.0
    %768 = vmatprep.mubr.f32.mxu0 0.0
    %769 = vmatmul.mubr.f32.gmra.mrb[0].mxu0 %v702
    %v770 = vpop.f32.mrb[0].mxu0
    %v771 = vadd.f32 0.0, %v770
    %v772 = vpop.f32.mrb[0].mxu0
    %v773 = vadd.f32 0.0, %v772
    %774 = vdwg.mxu0
    %775 = vmatprep.subr.mxu0 %v283
    %776 = vmatpush1.msra.mxu0 %v282
    %777 = vmatprep.subr.mxu0 %v287
    %778 = vmatpush1.msra.mxu0 %v286
    %779 = vmatprep.subr.mxu0 %v291
    %780 = vmatpush1.msra.mxu0 %v290
    %781 = vmatprep.subr.mxu0 %v295
    %782 = vmatpush1.msra.mxu0 %v294
    %783 = vmatprep.subr.mxu0 %v299
    %784 = vmatpush1.msra.mxu0 %v298
    %785 = vmatprep.subr.mxu0 %v303
    %786 = vmatpush1.msra.mxu0 %v302
    %787 = vmatprep.subr.mxu0 %v307
    %788 = vmatpush1.msra.mxu0 %v306
    %789 = vmatprep.subr.mxu0 %v311
    %790 = vmatpush1.msra.mxu0 %v310
    %791 = vmatprep.subr.mxu0 %v315
    %792 = vmatpush1.msra.mxu0 %v314
    %793 = vmatprep.subr.mxu0 %v319
    %794 = vmatpush1.msra.mxu0 %v318
    %795 = vmatprep.subr.mxu0 %v323
    %796 = vmatpush1.msra.mxu0 %v322
    %797 = vmatprep.subr.mxu0 %v327
    %798 = vmatpush1.msra.mxu0 %v326
    %799 = vmatprep.subr.mxu0 %v331
    %800 = vmatpush1.msra.mxu0 %v330
    %801 = vmatprep.subr.mxu0 %v335
    %802 = vmatpush1.msra.mxu0 %v334
    %803 = vmatprep.subr.mxu0 %v339
    %804 = vmatpush1.msra.mxu0 %v338
    %805 = vmatprep.subr.mxu0 %v343
    %806 = vmatpush1.msra.mxu0 %v342
    %807 = vmatprep.subr.mxu0 0.0
    %808 = vmatpush1.msra.mxu0 0.0
    %809 = vmatprep.subr.mxu0 0.0
    %810 = vmatpush1.msra.mxu0 0.0
    %811 = vmatprep.subr.mxu0 0.0
    %812 = vmatpush1.msra.mxu0 0.0
    %813 = vmatprep.subr.mxu0 0.0
    %814 = vmatpush1.msra.mxu0 0.0
    %815 = vmatprep.subr.mxu0 0.0
    %816 = vmatpush1.msra.mxu0 0.0
    %817 = vmatprep.subr.mxu0 0.0
    %818 = vmatpush1.msra.mxu0 0.0
    %819 = vmatprep.subr.mxu0 0.0
    %820 = vmatpush1.msra.mxu0 0.0
    %821 = vmatprep.subr.mxu0 0.0
    %822 = vmatpush1.msra.mxu0 0.0
    %823 = vmatprep.subr.mxu0 0.0
    %824 = vmatpush1.msra.mxu0 0.0
    %825 = vmatprep.subr.mxu0 0.0
    %826 = vmatpush1.msra.mxu0 0.0
    %827 = vmatprep.subr.mxu0 0.0
    %828 = vmatpush1.msra.mxu0 0.0
    %829 = vmatprep.subr.mxu0 0.0
    %830 = vmatpush1.msra.mxu0 0.0
    %831 = vmatprep.subr.mxu0 0.0
    %832 = vmatpush1.msra.mxu0 0.0
    %833 = vmatprep.subr.mxu0 0.0
    %834 = vmatpush1.msra.mxu0 0.0
    %835 = vmatprep.subr.mxu0 0.0
    %836 = vmatpush1.msra.mxu0 0.0
    %837 = vmatprep.subr.mxu0 0.0
    %838 = vmatpush1.msra.mxu0 0.0
    %839 = vmatprep.mubr.f32.mxu0 0.0
    %840 = vmatmul.mubr.f32.gmra.mrb[0].mxu0 %v702
    %v841 = vpop.f32.mrb[0].mxu0
    %v842 = vadd.f32 0.0, %v841
    %v843 = vpop.f32.mrb[0].mxu0
    %v844 = vadd.f32 0.0, %v843
    %845 = vdwg.mxu0
    %v850 = vrot.slane %v771, 4
    %v851 = vrot.slane %v773, 4
    %v852 = vrot.slane %v842, 4
    %v853 = vrot.slane %v844, 4
    %v858 = vadd.f32 %v193, %v850
    %v859 = vadd.f32 %v195, %v851
    %v860 = vadd.f32 %v270, %v852
    %v861 = vadd.f32 %v272, %v853
    %v862 = vxor.u32 %v858, 2147483648
    %v863 = vmul.f32 %v862, 1.442695
    %v864 = vpow.pop %v863
    %v865 = vadd.f32 %v864, 1.0
    %v866 = vrcp.pop %v865
    %v867 = vmul.f32 1.0, %v866
    %v868 = vxor.u32 %v859, 2147483648
    %v869 = vmul.f32 %v868, 1.442695
    %v870 = vpow.pop %v869
    %v871 = vadd.f32 %v870, 1.0
    %v872 = vrcp.pop %v871
    %v873 = vmul.f32 1.0, %v872
    %v874 = vtanh.pop %v860
    %v875 = vxor.u32 %v861, 2147483648
    %v876 = vmul.f32 %v875, 1.442695
    %v877 = vpow.pop %v876
    %v878 = vadd.f32 %v877, 1.0
    %v879 = vrcp.pop %v878
    %v880 = vmul.f32 1.0, %v879
    %v882 = vrot.slane %v697, 6
    %v884 = vmul.f32 %v873, %v882
    %v885 = vmul.f32 %v867, %v874
    %v886 = vadd.f32 %v884, %v885
    %v887 = vtanh.pop %v886
    %v888 = vmul.f32 %v880, %v887
    %889 = vst [vmem:[#allocation2] sm:$0x30] %v888
    %v891 = vrot.slane %v888, 4
    %893 = vmatprep.subr.mxu0 %v281
    %894 = vmatpush1.msra.mxu0 %v280
    %895 = vmatprep.subr.mxu0 %v285
    %896 = vmatpush1.msra.mxu0 %v284
    %897 = vmatprep.subr.mxu0 %v289
    %898 = vmatpush1.msra.mxu0 %v288
    %899 = vmatprep.subr.mxu0 %v293
    %900 = vmatpush1.msra.mxu0 %v292
    %901 = vmatprep.subr.mxu0 %v297
    %902 = vmatpush1.msra.mxu0 %v296
    %903 = vmatprep.subr.mxu0 %v301
    %904 = vmatpush1.msra.mxu0 %v300
    %905 = vmatprep.subr.mxu0 %v305
    %906 = vmatpush1.msra.mxu0 %v304
    %907 = vmatprep.subr.mxu0 %v309
    %908 = vmatpush1.msra.mxu0 %v308
    %909 = vmatprep.subr.mxu0 %v313
    %910 = vmatpush1.msra.mxu0 %v312
    %911 = vmatprep.subr.mxu0 %v317
    %912 = vmatpush1.msra.mxu0 %v316
    %913 = vmatprep.subr.mxu0 %v321
    %914 = vmatpush1.msra.mxu0 %v320
    %915 = vmatprep.subr.mxu0 %v325
    %916 = vmatpush1.msra.mxu0 %v324
    %917 = vmatprep.subr.mxu0 %v329
    %918 = vmatpush1.msra.mxu0 %v328
    %919 = vmatprep.subr.mxu0 %v333
    %920 = vmatpush1.msra.mxu0 %v332
    %921 = vmatprep.subr.mxu0 %v337
    %922 = vmatpush1.msra.mxu0 %v336
    %923 = vmatprep.subr.mxu0 %v341
    %924 = vmatpush1.msra.mxu0 %v340
    %925 = vmatprep.subr.mxu0 0.0
    %926 = vmatpush1.msra.mxu0 0.0
    %927 = vmatprep.subr.mxu0 0.0
    %928 = vmatpush1.msra.mxu0 0.0
    %929 = vmatprep.subr.mxu0 0.0
    %930 = vmatpush1.msra.mxu0 0.0
    %931 = vmatprep.subr.mxu0 0.0
    %932 = vmatpush1.msra.mxu0 0.0
    %933 = vmatprep.subr.mxu0 0.0
    %934 = vmatpush1.msra.mxu0 0.0
    %935 = vmatprep.subr.mxu0 0.0
    %936 = vmatpush1.msra.mxu0 0.0
    %937 = vmatprep.subr.mxu0 0.0
    %938 = vmatpush1.msra.mxu0 0.0
    %939 = vmatprep.subr.mxu0 0.0
    %940 = vmatpush1.msra.mxu0 0.0
    %941 = vmatprep.subr.mxu0 0.0
    %942 = vmatpush1.msra.mxu0 0.0
    %943 = vmatprep.subr.mxu0 0.0
    %944 = vmatpush1.msra.mxu0 0.0
    %945 = vmatprep.subr.mxu0 0.0
    %946 = vmatpush1.msra.mxu0 0.0
    %947 = vmatprep.subr.mxu0 0.0
    %948 = vmatpush1.msra.mxu0 0.0
    %949 = vmatprep.subr.mxu0 0.0
    %950 = vmatpush1.msra.mxu0 0.0
    %951 = vmatprep.subr.mxu0 0.0
    %952 = vmatpush1.msra.mxu0 0.0
    %953 = vmatprep.subr.mxu0 0.0
    %954 = vmatpush1.msra.mxu0 0.0
    %955 = vmatprep.subr.mxu0 0.0
    %956 = vmatpush1.msra.mxu0 0.0
    %957 = vmatprep.mubr.f32.mxu0 0.0
    %958 = vmatmul.mubr.f32.gmra.mrb[0].mxu0 %v891
    %v959 = vpop.f32.mrb[0].mxu0
    %v960 = vadd.f32 0.0, %v959
    %v961 = vpop.f32.mrb[0].mxu0
    %v962 = vadd.f32 0.0, %v961
    %963 = vdwg.mxu0
    %964 = vmatprep.subr.mxu0 %v283
    %965 = vmatpush1.msra.mxu0 %v282
    %966 = vmatprep.subr.mxu0 %v287
    %967 = vmatpush1.msra.mxu0 %v286
    %968 = vmatprep.subr.mxu0 %v291
    %969 = vmatpush1.msra.mxu0 %v290
    %970 = vmatprep.subr.mxu0 %v295
    %971 = vmatpush1.msra.mxu0 %v294
    %972 = vmatprep.subr.mxu0 %v299
    %973 = vmatpush1.msra.mxu0 %v298
    %974 = vmatprep.subr.mxu0 %v303
    %975 = vmatpush1.msra.mxu0 %v302
    %976 = vmatprep.subr.mxu0 %v307
    %977 = vmatpush1.msra.mxu0 %v306
    %978 = vmatprep.subr.mxu0 %v311
    %979 = vmatpush1.msra.mxu0 %v310
    %980 = vmatprep.subr.mxu0 %v315
    %981 = vmatpush1.msra.mxu0 %v314
    %982 = vmatprep.subr.mxu0 %v319
    %983 = vmatpush1.msra.mxu0 %v318
    %984 = vmatprep.subr.mxu0 %v323
    %985 = vmatpush1.msra.mxu0 %v322
    %986 = vmatprep.subr.mxu0 %v327
    %987 = vmatpush1.msra.mxu0 %v326
    %988 = vmatprep.subr.mxu0 %v331
    %989 = vmatpush1.msra.mxu0 %v330
    %990 = vmatprep.subr.mxu0 %v335
    %991 = vmatpush1.msra.mxu0 %v334
    %992 = vmatprep.subr.mxu0 %v339
    %993 = vmatpush1.msra.mxu0 %v338
    %994 = vmatprep.subr.mxu0 %v343
    %995 = vmatpush1.msra.mxu0 %v342
    %996 = vmatprep.subr.mxu0 0.0
    %997 = vmatpush1.msra.mxu0 0.0
    %998 = vmatprep.subr.mxu0 0.0
    %999 = vmatpush1.msra.mxu0 0.0
    %1000 = vmatprep.subr.mxu0 0.0
    %1001 = vmatpush1.msra.mxu0 0.0
    %1002 = vmatprep.subr.mxu0 0.0
    %1003 = vmatpush1.msra.mxu0 0.0
    %1004 = vmatprep.subr.mxu0 0.0
    %1005 = vmatpush1.msra.mxu0 0.0
    %1006 = vmatprep.subr.mxu0 0.0
    %1007 = vmatpush1.msra.mxu0 0.0
    %1008 = vmatprep.subr.mxu0 0.0
    %1009 = vmatpush1.msra.mxu0 0.0
    %1010 = vmatprep.subr.mxu0 0.0
    %1011 = vmatpush1.msra.mxu0 0.0
    %1012 = vmatprep.subr.mxu0 0.0
    %1013 = vmatpush1.msra.mxu0 0.0
    %1014 = vmatprep.subr.mxu0 0.0
    %1015 = vmatpush1.msra.mxu0 0.0
    %1016 = vmatprep.subr.mxu0 0.0
    %1017 = vmatpush1.msra.mxu0 0.0
    %1018 = vmatprep.subr.mxu0 0.0
    %1019 = vmatpush1.msra.mxu0 0.0
    %1020 = vmatprep.subr.mxu0 0.0
    %1021 = vmatpush1.msra.mxu0 0.0
    %1022 = vmatprep.subr.mxu0 0.0
    %1023 = vmatpush1.msra.mxu0 0.0
    %1024 = vmatprep.subr.mxu0 0.0
    %1025 = vmatpush1.msra.mxu0 0.0
    %1026 = vmatprep.subr.mxu0 0.0
    %1027 = vmatpush1.msra.mxu0 0.0
    %1028 = vmatprep.mubr.f32.mxu0 0.0
    %1029 = vmatmul.mubr.f32.gmra.mrb[0].mxu0 %v891
    %v1030 = vpop.f32.mrb[0].mxu0
    %v1031 = vadd.f32 0.0, %v1030
    %v1032 = vpop.f32.mrb[0].mxu0
    %v1033 = vadd.f32 0.0, %v1032
    %1034 = vdwg.mxu0
    %v1039 = vrot.slane %v960, 2
    %v1040 = vrot.slane %v962, 2
    %v1041 = vrot.slane %v1031, 2
    %v1042 = vrot.slane %v1033, 2
    %v1047 = vadd.f32 %v193, %v1039
    %v1048 = vadd.f32 %v195, %v1040
    %v1049 = vadd.f32 %v270, %v1041
    %v1050 = vadd.f32 %v272, %v1042
    %v1051 = vxor.u32 %v1047, 2147483648
    %v1052 = vmul.f32 %v1051, 1.442695
    %v1053 = vpow.pop %v1052
    %v1054 = vadd.f32 %v1053, 1.0
    %v1055 = vrcp.pop %v1054
    %v1056 = vmul.f32 1.0, %v1055
    %v1057 = vxor.u32 %v1048, 2147483648
    %v1058 = vmul.f32 %v1057, 1.442695
    %v1059 = vpow.pop %v1058
    %v1060 = vadd.f32 %v1059, 1.0
    %v1061 = vrcp.pop %v1060
    %v1062 = vmul.f32 1.0, %v1061
    %v1063 = vtanh.pop %v1049
    %v1064 = vxor.u32 %v1050, 2147483648
    %v1065 = vmul.f32 %v1064, 1.442695
    %v1066 = vpow.pop %v1065
    %v1067 = vadd.f32 %v1066, 1.0
    %v1068 = vrcp.pop %v1067
    %v1069 = vmul.f32 1.0, %v1068
    %v1071 = vrot.slane %v886, 6
    %v1073 = vmul.f32 %v1062, %v1071
    %v1074 = vmul.f32 %v1056, %v1063
    %v1075 = vadd.f32 %v1073, %v1074
    %v1076 = vtanh.pop %v1075
    %v1077 = vmul.f32 %v1069, %v1076
    %1078 = vst [vmem:[#allocation2] sm:$0xc0] %v1077
    %v1080 = vrot.slane %v1077, 6
    %1082 = vmatprep.subr.mxu0 %v281
    %1083 = vmatpush1.msra.mxu0 %v280
    %1084 = vmatprep.subr.mxu0 %v285
    %1085 = vmatpush1.msra.mxu0 %v284
    %1086 = vmatprep.subr.mxu0 %v289
    %1087 = vmatpush1.msra.mxu0 %v288
    %1088 = vmatprep.subr.mxu0 %v293
    %1089 = vmatpush1.msra.mxu0 %v292
    %1090 = vmatprep.subr.mxu0 %v297
    %1091 = vmatpush1.msra.mxu0 %v296
    %1092 = vmatprep.subr.mxu0 %v301
    %1093 = vmatpush1.msra.mxu0 %v300
    %1094 = vmatprep.subr.mxu0 %v305
    %1095 = vmatpush1.msra.mxu0 %v304
    %1096 = vmatprep.subr.mxu0 %v309
    %1097 = vmatpush1.msra.mxu0 %v308
    %1098 = vmatprep.subr.mxu0 %v313
    %1099 = vmatpush1.msra.mxu0 %v312
    %1100 = vmatprep.subr.mxu0 %v317
    %1101 = vmatpush1.msra.mxu0 %v316
    %1102 = vmatprep.subr.mxu0 %v321
    %1103 = vmatpush1.msra.mxu0 %v320
    %1104 = vmatprep.subr.mxu0 %v325
    %1105 = vmatpush1.msra.mxu0 %v324
    %1106 = vmatprep.subr.mxu0 %v329
    %1107 = vmatpush1.msra.mxu0 %v328
    %1108 = vmatprep.subr.mxu0 %v333
    %1109 = vmatpush1.msra.mxu0 %v332
    %1110 = vmatprep.subr.mxu0 %v337
    %1111 = vmatpush1.msra.mxu0 %v336
    %1112 = vmatprep.subr.mxu0 %v341
    %1113 = vmatpush1.msra.mxu0 %v340
    %1114 = vmatprep.subr.mxu0 0.0
    %1115 = vmatpush1.msra.mxu0 0.0
    %1116 = vmatprep.subr.mxu0 0.0
    %1117 = vmatpush1.msra.mxu0 0.0
    %1118 = vmatprep.subr.mxu0 0.0
    %1119 = vmatpush1.msra.mxu0 0.0
    %1120 = vmatprep.subr.mxu0 0.0
    %1121 = vmatpush1.msra.mxu0 0.0
    %1122 = vmatprep.subr.mxu0 0.0
    %1123 = vmatpush1.msra.mxu0 0.0
    %1124 = vmatprep.subr.mxu0 0.0
    %1125 = vmatpush1.msra.mxu0 0.0
    %1126 = vmatprep.subr.mxu0 0.0
    %1127 = vmatpush1.msra.mxu0 0.0
    %1128 = vmatprep.subr.mxu0 0.0
    %1129 = vmatpush1.msra.mxu0 0.0
    %1130 = vmatprep.subr.mxu0 0.0
    %1131 = vmatpush1.msra.mxu0 0.0
    %1132 = vmatprep.subr.mxu0 0.0
    %1133 = vmatpush1.msra.mxu0 0.0
    %1134 = vmatprep.subr.mxu0 0.0
    %1135 = vmatpush1.msra.mxu0 0.0
    %1136 = vmatprep.subr.mxu0 0.0
    %1137 = vmatpush1.msra.mxu0 0.0
    %1138 = vmatprep.subr.mxu0 0.0
    %1139 = vmatpush1.msra.mxu0 0.0
    %1140 = vmatprep.subr.mxu0 0.0
    %1141 = vmatpush1.msra.mxu0 0.0
    %1142 = vmatprep.subr.mxu0 0.0
    %1143 = vmatpush1.msra.mxu0 0.0
    %1144 = vmatprep.subr.mxu0 0.0
    %1145 = vmatpush1.msra.mxu0 0.0
    %1146 = vmatprep.mubr.f32.mxu0 0.0
    %1147 = vmatmul.mubr.f32.gmra.mrb[0].mxu0 %v1080
    %v1148 = vpop.f32.mrb[0].mxu0
    %v1149 = vadd.f32 0.0, %v1148
    %v1150 = vpop.f32.mrb[0].mxu0
    %v1151 = vadd.f32 0.0, %v1150
    %1152 = vdwg.mxu0
    %1153 = vmatprep.subr.mxu0 %v283
    %1154 = vmatpush1.msra.mxu0 %v282
    %1155 = vmatprep.subr.mxu0 %v287
    %1156 = vmatpush1.msra.mxu0 %v286
    %1157 = vmatprep.subr.mxu0 %v291
    %1158 = vmatpush1.msra.mxu0 %v290
    %1159 = vmatprep.subr.mxu0 %v295
    %1160 = vmatpush1.msra.mxu0 %v294
    %1161 = vmatprep.subr.mxu0 %v299
    %1162 = vmatpush1.msra.mxu0 %v298
    %1163 = vmatprep.subr.mxu0 %v303
    %1164 = vmatpush1.msra.mxu0 %v302
    %1165 = vmatprep.subr.mxu0 %v307
    %1166 = vmatpush1.msra.mxu0 %v306
    %1167 = vmatprep.subr.mxu0 %v311
    %1168 = vmatpush1.msra.mxu0 %v310
    %1169 = vmatprep.subr.mxu0 %v315
    %1170 = vmatpush1.msra.mxu0 %v314
    %1171 = vmatprep.subr.mxu0 %v319
    %1172 = vmatpush1.msra.mxu0 %v318
    %1173 = vmatprep.subr.mxu0 %v323
    %1174 = vmatpush1.msra.mxu0 %v322
    %1175 = vmatprep.subr.mxu0 %v327
    %1176 = vmatpush1.msra.mxu0 %v326
    %1177 = vmatprep.subr.mxu0 %v331
    %1178 = vmatpush1.msra.mxu0 %v330
    %1179 = vmatprep.subr.mxu0 %v335
    %1180 = vmatpush1.msra.mxu0 %v334
    %1181 = vmatprep.subr.mxu0 %v339
    %1182 = vmatpush1.msra.mxu0 %v338
    %1183 = vmatprep.subr.mxu0 %v343
    %1184 = vmatpush1.msra.mxu0 %v342
    %1185 = vmatprep.subr.mxu0 0.0
    %1186 = vmatpush1.msra.mxu0 0.0
    %1187 = vmatprep.subr.mxu0 0.0
    %1188 = vmatpush1.msra.mxu0 0.0
    %1189 = vmatprep.subr.mxu0 0.0
    %1190 = vmatpush1.msra.mxu0 0.0
    %1191 = vmatprep.subr.mxu0 0.0
    %1192 = vmatpush1.msra.mxu0 0.0
    %1193 = vmatprep.subr.mxu0 0.0
    %1194 = vmatpush1.msra.mxu0 0.0
    %1195 = vmatprep.subr.mxu0 0.0
    %1196 = vmatpush1.msra.mxu0 0.0
    %1197 = vmatprep.subr.mxu0 0.0
    %1198 = vmatpush1.msra.mxu0 0.0
    %1199 = vmatprep.subr.mxu0 0.0
    %1200 = vmatpush1.msra.mxu0 0.0
    %1201 = vmatprep.subr.mxu0 0.0
    %1202 = vmatpush1.msra.mxu0 0.0
    %1203 = vmatprep.subr.mxu0 0.0
    %1204 = vmatpush1.msra.mxu0 0.0
    %1205 = vmatprep.subr.mxu0 0.0
    %1206 = vmatpush1.msra.mxu0 0.0
    %1207 = vmatprep.subr.mxu0 0.0
    %1208 = vmatpush1.msra.mxu0 0.0
    %1209 = vmatprep.subr.mxu0 0.0
    %1210 = vmatpush1.msra.mxu0 0.0
    %1211 = vmatprep.subr.mxu0 0.0
    %1212 = vmatpush1.msra.mxu0 0.0
    %1213 = vmatprep.subr.mxu0 0.0
    %1214 = vmatpush1.msra.mxu0 0.0
    %1215 = vmatprep.subr.mxu0 0.0
    %1216 = vmatpush1.msra.mxu0 0.0
    %1217 = vmatprep.mubr.f32.mxu0 0.0
    %1218 = vmatmul.mubr.f32.gmra.mrb[0].mxu0 %v1080
    %v1219 = vpop.f32.mrb[0].mxu0
    %v1220 = vadd.f32 0.0, %v1219
    %v1221 = vpop.f32.mrb[0].mxu0
    %v1222 = vadd.f32 0.0, %v1221
    %1223 = vdwg.mxu0
    %v1224 = vadd.f32 %v199, %v1149
    %v1225 = vadd.f32 %v201, %v1151
    %v1226 = vadd.f32 %v276, %v1220
    %v1227 = vadd.f32 %v278, %v1222
    %v1228 = vxor.u32 %v1224, 2147483648
    %v1229 = vmul.f32 %v1228, 1.442695
    %v1230 = vpow.pop %v1229
    %v1231 = vadd.f32 %v1230, 1.0
    %v1232 = vrcp.pop %v1231
    %v1233 = vmul.f32 1.0, %v1232
    %v1234 = vxor.u32 %v1225, 2147483648
    %v1235 = vmul.f32 %v1234, 1.442695
    %v1236 = vpow.pop %v1235
    %v1237 = vadd.f32 %v1236, 1.0
    %v1238 = vrcp.pop %v1237
    %v1239 = vmul.f32 1.0, %v1238
    %v1240 = vtanh.pop %v1226
    %v1241 = vxor.u32 %v1227, 2147483648
    %v1242 = vmul.f32 %v1241, 1.442695
    %v1243 = vpow.pop %v1242
    %v1244 = vadd.f32 %v1243, 1.0
    %v1245 = vrcp.pop %v1244
    %v1246 = vmul.f32 1.0, %v1245
    %v1248 = vrot.slane %v1075, 6
    %v1250 = vmul.f32 %v1239, %v1248
    %v1251 = vmul.f32 %v1233, %v1240
    %v1252 = vadd.f32 %v1250, %v1251
    %v1253 = vtanh.pop %v1252
    %v1254 = vmul.f32 %v1246, %v1253
    %1255 = vst [vmem:[#allocation2 + $0x8] sm:$0x3] %v1254
    %1256 = vmatprep.subr.mxu0 %v281
    %1257 = vmatpush1.msra.mxu0 %v280
    %1258 = vmatprep.subr.mxu0 %v285
    %1259 = vmatpush1.msra.mxu0 %v284
    %1260 = vmatprep.subr.mxu0 %v289
    %1261 = vmatpush1.msra.mxu0 %v288
    %1262 = vmatprep.subr.mxu0 %v293
    %1263 = vmatpush1.msra.mxu0 %v292
    %1264 = vmatprep.subr.mxu0 %v297
    %1265 = vmatpush1.msra.mxu0 %v296
    %1266 = vmatprep.subr.mxu0 %v301
    %1267 = vmatpush1.msra.mxu0 %v300
    %1268 = vmatprep.subr.mxu0 %v305
    %1269 = vmatpush1.msra.mxu0 %v304
    %1270 = vmatprep.subr.mxu0 %v309
    %1271 = vmatpush1.msra.mxu0 %v308
    %1272 = vmatprep.subr.mxu0 %v313
    %1273 = vmatpush1.msra.mxu0 %v312
    %1274 = vmatprep.subr.mxu0 %v317
    %1275 = vmatpush1.msra.mxu0 %v316
    %1276 = vmatprep.subr.mxu0 %v321
    %1277 = vmatpush1.msra.mxu0 %v320
    %1278 = vmatprep.subr.mxu0 %v325
    %1279 = vmatpush1.msra.mxu0 %v324
    %1280 = vmatprep.subr.mxu0 %v329
    %1281 = vmatpush1.msra.mxu0 %v328
    %1282 = vmatprep.subr.mxu0 %v333
    %1283 = vmatpush1.msra.mxu0 %v332
    %1284 = vmatprep.subr.mxu0 %v337
    %1285 = vmatpush1.msra.mxu0 %v336
    %1286 = vmatprep.subr.mxu0 %v341
    %1287 = vmatpush1.msra.mxu0 %v340
    %1288 = vmatprep.subr.mxu0 0.0
    %1289 = vmatpush1.msra.mxu0 0.0
    %1290 = vmatprep.subr.mxu0 0.0
    %1291 = vmatpush1.msra.mxu0 0.0
    %1292 = vmatprep.subr.mxu0 0.0
    %1293 = vmatpush1.msra.mxu0 0.0
    %1294 = vmatprep.subr.mxu0 0.0
    %1295 = vmatpush1.msra.mxu0 0.0
    %1296 = vmatprep.subr.mxu0 0.0
    %1297 = vmatpush1.msra.mxu0 0.0
    %1298 = vmatprep.subr.mxu0 0.0
    %1299 = vmatpush1.msra.mxu0 0.0
    %1300 = vmatprep.subr.mxu0 0.0
    %1301 = vmatpush1.msra.mxu0 0.0
    %1302 = vmatprep.subr.mxu0 0.0
    %1303 = vmatpush1.msra.mxu0 0.0
    %1304 = vmatprep.subr.mxu0 0.0
    %1305 = vmatpush1.msra.mxu0 0.0
    %1306 = vmatprep.subr.mxu0 0.0
    %1307 = vmatpush1.msra.mxu0 0.0
    %1308 = vmatprep.subr.mxu0 0.0
    %1309 = vmatpush1.msra.mxu0 0.0
    %1310 = vmatprep.subr.mxu0 0.0
    %1311 = vmatpush1.msra.mxu0 0.0
    %1312 = vmatprep.subr.mxu0 0.0
    %1313 = vmatpush1.msra.mxu0 0.0
    %1314 = vmatprep.subr.mxu0 0.0
    %1315 = vmatpush1.msra.mxu0 0.0
    %1316 = vmatprep.subr.mxu0 0.0
    %1317 = vmatpush1.msra.mxu0 0.0
    %1318 = vmatprep.subr.mxu0 0.0
    %1319 = vmatpush1.msra.mxu0 0.0
    %1320 = vmatprep.mubr.f32.mxu0 0.0
    %1321 = vmatmul.mubr.f32.gmra.mrb[0].mxu0 %v1254
    %v1322 = vpop.f32.mrb[0].mxu0
    %v1323 = vadd.f32 0.0, %v1322
    %v1324 = vpop.f32.mrb[0].mxu0
    %v1325 = vadd.f32 0.0, %v1324
    %1326 = vdwg.mxu0
    %1327 = vmatprep.subr.mxu0 %v283
    %1328 = vmatpush1.msra.mxu0 %v282
    %1329 = vmatprep.subr.mxu0 %v287
    %1330 = vmatpush1.msra.mxu0 %v286
    %1331 = vmatprep.subr.mxu0 %v291
    %1332 = vmatpush1.msra.mxu0 %v290
    %1333 = vmatprep.subr.mxu0 %v295
    %1334 = vmatpush1.msra.mxu0 %v294
    %1335 = vmatprep.subr.mxu0 %v299
    %1336 = vmatpush1.msra.mxu0 %v298
    %1337 = vmatprep.subr.mxu0 %v303
    %1338 = vmatpush1.msra.mxu0 %v302
    %1339 = vmatprep.subr.mxu0 %v307
    %1340 = vmatpush1.msra.mxu0 %v306
    %1341 = vmatprep.subr.mxu0 %v311
    %1342 = vmatpush1.msra.mxu0 %v310
    %1343 = vmatprep.subr.mxu0 %v315
    %1344 = vmatpush1.msra.mxu0 %v314
    %1345 = vmatprep.subr.mxu0 %v319
    %1346 = vmatpush1.msra.mxu0 %v318
    %1347 = vmatprep.subr.mxu0 %v323
    %1348 = vmatpush1.msra.mxu0 %v322
    %1349 = vmatprep.subr.mxu0 %v327
    %1350 = vmatpush1.msra.mxu0 %v326
    %1351 = vmatprep.subr.mxu0 %v331
    %1352 = vmatpush1.msra.mxu0 %v330
    %1353 = vmatprep.subr.mxu0 %v335
    %1354 = vmatpush1.msra.mxu0 %v334
    %1355 = vmatprep.subr.mxu0 %v339
    %1356 = vmatpush1.msra.mxu0 %v338
    %1357 = vmatprep.subr.mxu0 %v343
    %1358 = vmatpush1.msra.mxu0 %v342
    %1359 = vmatprep.subr.mxu0 0.0
    %1360 = vmatpush1.msra.mxu0 0.0
    %1361 = vmatprep.subr.mxu0 0.0
    %1362 = vmatpush1.msra.mxu0 0.0
    %1363 = vmatprep.subr.mxu0 0.0
    %1364 = vmatpush1.msra.mxu0 0.0
    %1365 = vmatprep.subr.mxu0 0.0
    %1366 = vmatpush1.msra.mxu0 0.0
    %1367 = vmatprep.subr.mxu0 0.0
    %1368 = vmatpush1.msra.mxu0 0.0
    %1369 = vmatprep.subr.mxu0 0.0
    %1370 = vmatpush1.msra.mxu0 0.0
    %1371 = vmatprep.subr.mxu0 0.0
    %1372 = vmatpush1.msra.mxu0 0.0
    %1373 = vmatprep.subr.mxu0 0.0
    %1374 = vmatpush1.msra.mxu0 0.0
    %1375 = vmatprep.subr.mxu0 0.0
    %1376 = vmatpush1.msra.mxu0 0.0
    %1377 = vmatprep.subr.mxu0 0.0
    %1378 = vmatpush1.msra.mxu0 0.0
    %1379 = vmatprep.subr.mxu0 0.0
    %1380 = vmatpush1.msra.mxu0 0.0
    %1381 = vmatprep.subr.mxu0 0.0
    %1382 = vmatpush1.msra.mxu0 0.0
    %1383 = vmatprep.subr.mxu0 0.0
    %1384 = vmatpush1.msra.mxu0 0.0
    %1385 = vmatprep.subr.mxu0 0.0
    %1386 = vmatpush1.msra.mxu0 0.0
    %1387 = vmatprep.subr.mxu0 0.0
    %1388 = vmatpush1.msra.mxu0 0.0
    %1389 = vmatprep.subr.mxu0 0.0
    %1390 = vmatpush1.msra.mxu0 0.0
    %1391 = vmatprep.mubr.f32.mxu0 0.0
    %1392 = vmatmul.mubr.f32.gmra.mrb[0].mxu0 %v1254
    %v1393 = vpop.f32.mrb[0].mxu0
    %v1394 = vadd.f32 0.0, %v1393
    %v1395 = vpop.f32.mrb[0].mxu0
    %v1396 = vadd.f32 0.0, %v1395
    %1397 = vdwg.mxu0
    %v1402 = vrot.slane %v1323, 6
    %v1403 = vrot.slane %v1325, 6
    %v1404 = vrot.slane %v1394, 6
    %v1405 = vrot.slane %v1396, 6
    %v1410 = vadd.f32 %v199, %v1402
    %v1411 = vadd.f32 %v201, %v1403
    %v1412 = vadd.f32 %v276, %v1404
    %v1413 = vadd.f32 %v278, %v1405
    %v1414 = vxor.u32 %v1410, 2147483648
    %v1415 = vmul.f32 %v1414, 1.442695
    %v1416 = vpow.pop %v1415
    %v1417 = vadd.f32 %v1416, 1.0
    %v1418 = vrcp.pop %v1417
    %v1419 = vmul.f32 1.0, %v1418
    %v1420 = vxor.u32 %v1411, 2147483648
    %v1421 = vmul.f32 %v1420, 1.442695
    %v1422 = vpow.pop %v1421
    %v1423 = vadd.f32 %v1422, 1.0
    %v1424 = vrcp.pop %v1423
    %v1425 = vmul.f32 1.0, %v1424
    %v1426 = vtanh.pop %v1412
    %v1427 = vxor.u32 %v1413, 2147483648
    %v1428 = vmul.f32 %v1427, 1.442695
    %v1429 = vpow.pop %v1428
    %v1430 = vadd.f32 %v1429, 1.0
    %v1431 = vrcp.pop %v1430
    %v1432 = vmul.f32 1.0, %v1431
    %v1434 = vrot.slane %v1252, 6
    %v1436 = vmul.f32 %v1425, %v1434
    %v1437 = vmul.f32 %v1419, %v1426
    %v1438 = vadd.f32 %v1436, %v1437
    %v1439 = vtanh.pop %v1438
    %v1440 = vmul.f32 %v1432, %v1439
    %1441 = vst [vmem:[#allocation2 + $0x8] sm:$0xc] %v1440
    %v1443 = vrot.slane %v1440, 2
    %1445 = vmatprep.subr.mxu0 %v281
    %1446 = vmatpush1.msra.mxu0 %v280
    %1447 = vmatprep.subr.mxu0 %v285
    %1448 = vmatpush1.msra.mxu0 %v284
    %1449 = vmatprep.subr.mxu0 %v289
    %1450 = vmatpush1.msra.mxu0 %v288
    %1451 = vmatprep.subr.mxu0 %v293
    %1452 = vmatpush1.msra.mxu0 %v292
    %1453 = vmatprep.subr.mxu0 %v297
    %1454 = vmatpush1.msra.mxu0 %v296
    %1455 = vmatprep.subr.mxu0 %v301
    %1456 = vmatpush1.msra.mxu0 %v300
    %1457 = vmatprep.subr.mxu0 %v305
    %1458 = vmatpush1.msra.mxu0 %v304
    %1459 = vmatprep.subr.mxu0 %v309
    %1460 = vmatpush1.msra.mxu0 %v308
    %1461 = vmatprep.subr.mxu0 %v313
    %1462 = vmatpush1.msra.mxu0 %v312
    %1463 = vmatprep.subr.mxu0 %v317
    %1464 = vmatpush1.msra.mxu0 %v316
    %1465 = vmatprep.subr.mxu0 %v321
    %1466 = vmatpush1.msra.mxu0 %v320
    %1467 = vmatprep.subr.mxu0 %v325
    %1468 = vmatpush1.msra.mxu0 %v324
    %1469 = vmatprep.subr.mxu0 %v329
    %1470 = vmatpush1.msra.mxu0 %v328
    %1471 = vmatprep.subr.mxu0 %v333
    %1472 = vmatpush1.msra.mxu0 %v332
    %1473 = vmatprep.subr.mxu0 %v337
    %1474 = vmatpush1.msra.mxu0 %v336
    %1475 = vmatprep.subr.mxu0 %v341
    %1476 = vmatpush1.msra.mxu0 %v340
    %1477 = vmatprep.subr.mxu0 0.0
    %1478 = vmatpush1.msra.mxu0 0.0
    %1479 = vmatprep.subr.mxu0 0.0
    %1480 = vmatpush1.msra.mxu0 0.0
    %1481 = vmatprep.subr.mxu0 0.0
    %1482 = vmatpush1.msra.mxu0 0.0
    %1483 = vmatprep.subr.mxu0 0.0
    %1484 = vmatpush1.msra.mxu0 0.0
    %1485 = vmatprep.subr.mxu0 0.0
    %1486 = vmatpush1.msra.mxu0 0.0
    %1487 = vmatprep.subr.mxu0 0.0
    %1488 = vmatpush1.msra.mxu0 0.0
    %1489 = vmatprep.subr.mxu0 0.0
    %1490 = vmatpush1.msra.mxu0 0.0
    %1491 = vmatprep.subr.mxu0 0.0
    %1492 = vmatpush1.msra.mxu0 0.0
    %1493 = vmatprep.subr.mxu0 0.0
    %1494 = vmatpush1.msra.mxu0 0.0
    %1495 = vmatprep.subr.mxu0 0.0
    %1496 = vmatpush1.msra.mxu0 0.0
    %1497 = vmatprep.subr.mxu0 0.0
    %1498 = vmatpush1.msra.mxu0 0.0
    %1499 = vmatprep.subr.mxu0 0.0
    %1500 = vmatpush1.msra.mxu0 0.0
    %1501 = vmatprep.subr.mxu0 0.0
    %1502 = vmatpush1.msra.mxu0 0.0
    %1503 = vmatprep.subr.mxu0 0.0
    %1504 = vmatpush1.msra.mxu0 0.0
    %1505 = vmatprep.subr.mxu0 0.0
    %1506 = vmatpush1.msra.mxu0 0.0
    %1507 = vmatprep.subr.mxu0 0.0
    %1508 = vmatpush1.msra.mxu0 0.0
    %1509 = vmatprep.mubr.f32.mxu0 0.0
    %1510 = vmatmul.mubr.f32.gmra.mrb[0].mxu0 %v1443
    %v1511 = vpop.f32.mrb[0].mxu0
    %v1512 = vadd.f32 0.0, %v1511
    %v1513 = vpop.f32.mrb[0].mxu0
    %v1514 = vadd.f32 0.0, %v1513
    %1515 = vdwg.mxu0
    %1516 = vmatprep.subr.mxu0 %v283
    %1517 = vmatpush1.msra.mxu0 %v282
    %1518 = vmatprep.subr.mxu0 %v287
    %1519 = vmatpush1.msra.mxu0 %v286
    %1520 = vmatprep.subr.mxu0 %v291
    %1521 = vmatpush1.msra.mxu0 %v290
    %1522 = vmatprep.subr.mxu0 %v295
    %1523 = vmatpush1.msra.mxu0 %v294
    %1524 = vmatprep.subr.mxu0 %v299
    %1525 = vmatpush1.msra.mxu0 %v298
    %1526 = vmatprep.subr.mxu0 %v303
    %1527 = vmatpush1.msra.mxu0 %v302
    %1528 = vmatprep.subr.mxu0 %v307
    %1529 = vmatpush1.msra.mxu0 %v306
    %1530 = vmatprep.subr.mxu0 %v311
    %1531 = vmatpush1.msra.mxu0 %v310
    %1532 = vmatprep.subr.mxu0 %v315
    %1533 = vmatpush1.msra.mxu0 %v314
    %1534 = vmatprep.subr.mxu0 %v319
    %1535 = vmatpush1.msra.mxu0 %v318
    %1536 = vmatprep.subr.mxu0 %v323
    %1537 = vmatpush1.msra.mxu0 %v322
    %1538 = vmatprep.subr.mxu0 %v327
    %1539 = vmatpush1.msra.mxu0 %v326
    %1540 = vmatprep.subr.mxu0 %v331
    %1541 = vmatpush1.msra.mxu0 %v330
    %1542 = vmatprep.subr.mxu0 %v335
    %1543 = vmatpush1.msra.mxu0 %v334
    %1544 = vmatprep.subr.mxu0 %v339
    %1545 = vmatpush1.msra.mxu0 %v338
    %1546 = vmatprep.subr.mxu0 %v343
    %1547 = vmatpush1.msra.mxu0 %v342
    %1548 = vmatprep.subr.mxu0 0.0
    %1549 = vmatpush1.msra.mxu0 0.0
    %1550 = vmatprep.subr.mxu0 0.0
    %1551 = vmatpush1.msra.mxu0 0.0
    %1552 = vmatprep.subr.mxu0 0.0
    %1553 = vmatpush1.msra.mxu0 0.0
    %1554 = vmatprep.subr.mxu0 0.0
    %1555 = vmatpush1.msra.mxu0 0.0
    %1556 = vmatprep.subr.mxu0 0.0
    %1557 = vmatpush1.msra.mxu0 0.0
    %1558 = vmatprep.subr.mxu0 0.0
    %1559 = vmatpush1.msra.mxu0 0.0
    %1560 = vmatprep.subr.mxu0 0.0
    %1561 = vmatpush1.msra.mxu0 0.0
    %1562 = vmatprep.subr.mxu0 0.0
    %1563 = vmatpush1.msra.mxu0 0.0
    %1564 = vmatprep.subr.mxu0 0.0
    %1565 = vmatpush1.msra.mxu0 0.0
    %1566 = vmatprep.subr.mxu0 0.0
    %1567 = vmatpush1.msra.mxu0 0.0
    %1568 = vmatprep.subr.mxu0 0.0
    %1569 = vmatpush1.msra.mxu0 0.0
    %1570 = vmatprep.subr.mxu0 0.0
    %1571 = vmatpush1.msra.mxu0 0.0
    %1572 = vmatprep.subr.mxu0 0.0
    %1573 = vmatpush1.msra.mxu0 0.0
    %1574 = vmatprep.subr.mxu0 0.0
    %1575 = vmatpush1.msra.mxu0 0.0
    %1576 = vmatprep.subr.mxu0 0.0
    %1577 = vmatpush1.msra.mxu0 0.0
    %1578 = vmatprep.subr.mxu0 0.0
    %1579 = vmatpush1.msra.mxu0 0.0
    %1580 = vmatprep.mubr.f32.mxu0 0.0
    %1581 = vmatmul.mubr.f32.gmra.mrb[0].mxu0 %v1443
    %v1582 = vpop.f32.mrb[0].mxu0
    %v1583 = vadd.f32 0.0, %v1582
    %v1584 = vpop.f32.mrb[0].mxu0
    %v1585 = vadd.f32 0.0, %v1584
    %1586 = vdwg.mxu0
    %v1591 = vrot.slane %v1512, 4
    %v1592 = vrot.slane %v1514, 4
    %v1593 = vrot.slane %v1583, 4
    %v1594 = vrot.slane %v1585, 4
    %v1599 = vadd.f32 %v199, %v1591
    %v1600 = vadd.f32 %v201, %v1592
    %v1601 = vadd.f32 %v276, %v1593
    %v1602 = vadd.f32 %v278, %v1594
    %v1603 = vxor.u32 %v1599, 2147483648
    %v1604 = vmul.f32 %v1603, 1.442695
    %v1605 = vpow.pop %v1604
    %v1606 = vadd.f32 %v1605, 1.0
    %v1607 = vrcp.pop %v1606
    %v1608 = vmul.f32 1.0, %v1607
    %v1609 = vxor.u32 %v1600, 2147483648
    %v1610 = vmul.f32 %v1609, 1.442695
    %v1611 = vpow.pop %v1610
    %v1612 = vadd.f32 %v1611, 1.0
    %v1613 = vrcp.pop %v1612
    %v1614 = vmul.f32 1.0, %v1613
    %v1615 = vtanh.pop %v1601
    %v1616 = vxor.u32 %v1602, 2147483648
    %v1617 = vmul.f32 %v1616, 1.442695
    %v1618 = vpow.pop %v1617
    %v1619 = vadd.f32 %v1618, 1.0
    %v1620 = vrcp.pop %v1619
    %v1621 = vmul.f32 1.0, %v1620
    %v1623 = vrot.slane %v1438, 6
    %v1625 = vmul.f32 %v1614, %v1623
    %v1626 = vmul.f32 %v1608, %v1615
    %v1627 = vadd.f32 %v1625, %v1626
    %v1628 = vtanh.pop %v1627
    %v1629 = vmul.f32 %v1621, %v1628
    %1630 = vst [vmem:[#allocation2 + $0x8] sm:$0x30] %v1629
    %v1632 = vrot.slane %v1629, 4
    %1634 = vmatprep.subr.mxu0 %v281
    %1635 = vmatpush1.msra.mxu0 %v280
    %1636 = vmatprep.subr.mxu0 %v285
    %1637 = vmatpush1.msra.mxu0 %v284
    %1638 = vmatprep.subr.mxu0 %v289
    %1639 = vmatpush1.msra.mxu0 %v288
    %1640 = vmatprep.subr.mxu0 %v293
    %1641 = vmatpush1.msra.mxu0 %v292
    %1642 = vmatprep.subr.mxu0 %v297
    %1643 = vmatpush1.msra.mxu0 %v296
    %1644 = vmatprep.subr.mxu0 %v301
    %1645 = vmatpush1.msra.mxu0 %v300
    %1646 = vmatprep.subr.mxu0 %v305
    %1647 = vmatpush1.msra.mxu0 %v304
    %1648 = vmatprep.subr.mxu0 %v309
    %1649 = vmatpush1.msra.mxu0 %v308
    %1650 = vmatprep.subr.mxu0 %v313
    %1651 = vmatpush1.msra.mxu0 %v312
    %1652 = vmatprep.subr.mxu0 %v317
    %1653 = vmatpush1.msra.mxu0 %v316
    %1654 = vmatprep.subr.mxu0 %v321
    %1655 = vmatpush1.msra.mxu0 %v320
    %1656 = vmatprep.subr.mxu0 %v325
    %1657 = vmatpush1.msra.mxu0 %v324
    %1658 = vmatprep.subr.mxu0 %v329
    %1659 = vmatpush1.msra.mxu0 %v328
    %1660 = vmatprep.subr.mxu0 %v333
    %1661 = vmatpush1.msra.mxu0 %v332
    %1662 = vmatprep.subr.mxu0 %v337
    %1663 = vmatpush1.msra.mxu0 %v336
    %1664 = vmatprep.subr.mxu0 %v341
    %1665 = vmatpush1.msra.mxu0 %v340
    %1666 = vmatprep.subr.mxu0 0.0
    %1667 = vmatpush1.msra.mxu0 0.0
    %1668 = vmatprep.subr.mxu0 0.0
    %1669 = vmatpush1.msra.mxu0 0.0
    %1670 = vmatprep.subr.mxu0 0.0
    %1671 = vmatpush1.msra.mxu0 0.0
    %1672 = vmatprep.subr.mxu0 0.0
    %1673 = vmatpush1.msra.mxu0 0.0
    %1674 = vmatprep.subr.mxu0 0.0
    %1675 = vmatpush1.msra.mxu0 0.0
    %1676 = vmatprep.subr.mxu0 0.0
    %1677 = vmatpush1.msra.mxu0 0.0
    %1678 = vmatprep.subr.mxu0 0.0
    %1679 = vmatpush1.msra.mxu0 0.0
    %1680 = vmatprep.subr.mxu0 0.0
    %1681 = vmatpush1.msra.mxu0 0.0
    %1682 = vmatprep.subr.mxu0 0.0
    %1683 = vmatpush1.msra.mxu0 0.0
    %1684 = vmatprep.subr.mxu0 0.0
    %1685 = vmatpush1.msra.mxu0 0.0
    %1686 = vmatprep.subr.mxu0 0.0
    %1687 = vmatpush1.msra.mxu0 0.0
    %1688 = vmatprep.subr.mxu0 0.0
    %1689 = vmatpush1.msra.mxu0 0.0
    %1690 = vmatprep.subr.mxu0 0.0
    %1691 = vmatpush1.msra.mxu0 0.0
    %1692 = vmatprep.subr.mxu0 0.0
    %1693 = vmatpush1.msra.mxu0 0.0
    %1694 = vmatprep.subr.mxu0 0.0
    %1695 = vmatpush1.msra.mxu0 0.0
    %1696 = vmatprep.subr.mxu0 0.0
    %1697 = vmatpush1.msra.mxu0 0.0
    %1698 = vmatprep.mubr.f32.mxu0 0.0
    %1699 = vmatmul.mubr.f32.gmra.mrb[0].mxu0 %v1632
    %v1700 = vpop.f32.mrb[0].mxu0
    %v1701 = vadd.f32 0.0, %v1700
    %v1702 = vpop.f32.mrb[0].mxu0
    %v1703 = vadd.f32 0.0, %v1702
    %1704 = vdwg.mxu0
    %1705 = vmatprep.subr.mxu0 %v283
    %1706 = vmatpush1.msra.mxu0 %v282
    %1707 = vmatprep.subr.mxu0 %v287
    %1708 = vmatpush1.msra.mxu0 %v286
    %1709 = vmatprep.subr.mxu0 %v291
    %1710 = vmatpush1.msra.mxu0 %v290
    %1711 = vmatprep.subr.mxu0 %v295
    %1712 = vmatpush1.msra.mxu0 %v294
    %1713 = vmatprep.subr.mxu0 %v299
    %1714 = vmatpush1.msra.mxu0 %v298
    %1715 = vmatprep.subr.mxu0 %v303
    %1716 = vmatpush1.msra.mxu0 %v302
    %1717 = vmatprep.subr.mxu0 %v307
    %1718 = vmatpush1.msra.mxu0 %v306
    %1719 = vmatprep.subr.mxu0 %v311
    %1720 = vmatpush1.msra.mxu0 %v310
    %1721 = vmatprep.subr.mxu0 %v315
    %1722 = vmatpush1.msra.mxu0 %v314
    %1723 = vmatprep.subr.mxu0 %v319
    %1724 = vmatpush1.msra.mxu0 %v318
    %1725 = vmatprep.subr.mxu0 %v323
    %1726 = vmatpush1.msra.mxu0 %v322
    %1727 = vmatprep.subr.mxu0 %v327
    %1728 = vmatpush1.msra.mxu0 %v326
    %1729 = vmatprep.subr.mxu0 %v331
    %1730 = vmatpush1.msra.mxu0 %v330
    %1731 = vmatprep.subr.mxu0 %v335
    %1732 = vmatpush1.msra.mxu0 %v334
    %1733 = vmatprep.subr.mxu0 %v339
    %1734 = vmatpush1.msra.mxu0 %v338
    %1735 = vmatprep.subr.mxu0 %v343
    %1736 = vmatpush1.msra.mxu0 %v342
    %1737 = vmatprep.subr.mxu0 0.0
    %1738 = vmatpush1.msra.mxu0 0.0
    %1739 = vmatprep.subr.mxu0 0.0
    %1740 = vmatpush1.msra.mxu0 0.0
    %1741 = vmatprep.subr.mxu0 0.0
    %1742 = vmatpush1.msra.mxu0 0.0
    %1743 = vmatprep.subr.mxu0 0.0
    %1744 = vmatpush1.msra.mxu0 0.0
    %1745 = vmatprep.subr.mxu0 0.0
    %1746 = vmatpush1.msra.mxu0 0.0
    %1747 = vmatprep.subr.mxu0 0.0
    %1748 = vmatpush1.msra.mxu0 0.0
    %1749 = vmatprep.subr.mxu0 0.0
    %1750 = vmatpush1.msra.mxu0 0.0
    %1751 = vmatprep.subr.mxu0 0.0
    %1752 = vmatpush1.msra.mxu0 0.0
    %1753 = vmatprep.subr.mxu0 0.0
    %1754 = vmatpush1.msra.mxu0 0.0
    %1755 = vmatprep.subr.mxu0 0.0
    %1756 = vmatpush1.msra.mxu0 0.0
    %1757 = vmatprep.subr.mxu0 0.0
    %1758 = vmatpush1.msra.mxu0 0.0
    %1759 = vmatprep.subr.mxu0 0.0
    %1760 = vmatpush1.msra.mxu0 0.0
    %1761 = vmatprep.subr.mxu0 0.0
    %1762 = vmatpush1.msra.mxu0 0.0
    %1763 = vmatprep.subr.mxu0 0.0
    %1764 = vmatpush1.msra.mxu0 0.0
    %1765 = vmatprep.subr.mxu0 0.0
    %1766 = vmatpush1.msra.mxu0 0.0
    %1767 = vmatprep.subr.mxu0 0.0
    %1768 = vmatpush1.msra.mxu0 0.0
    %1769 = vmatprep.mubr.f32.mxu0 0.0
    %1770 = vmatmul.mubr.f32.gmra.mrb[0].mxu0 %v1632
    %v1771 = vpop.f32.mrb[0].mxu0
    %v1772 = vadd.f32 0.0, %v1771
    %v1773 = vpop.f32.mrb[0].mxu0
    %v1774 = vadd.f32 0.0, %v1773
    %1775 = vdwg.mxu0
    %v1780 = vrot.slane %v1701, 2
    %v1781 = vrot.slane %v1703, 2
    %v1782 = vrot.slane %v1772, 2
    %v1783 = vrot.slane %v1774, 2
    %v1788 = vadd.f32 %v199, %v1780
    %v1789 = vadd.f32 %v201, %v1781
    %v1790 = vadd.f32 %v276, %v1782
    %v1791 = vadd.f32 %v278, %v1783
    %v1792 = vxor.u32 %v1788, 2147483648
    %v1793 = vmul.f32 %v1792, 1.442695
    %v1794 = vpow.pop %v1793
    %v1795 = vadd.f32 %v1794, 1.0
    %v1796 = vrcp.pop %v1795
    %v1797 = vmul.f32 1.0, %v1796
    %v1798 = vxor.u32 %v1789, 2147483648
    %v1799 = vmul.f32 %v1798, 1.442695
    %v1800 = vpow.pop %v1799
    %v1801 = vadd.f32 %v1800, 1.0
    %v1802 = vrcp.pop %v1801
    %v1803 = vmul.f32 1.0, %v1802
    %v1804 = vtanh.pop %v1790
    %v1805 = vxor.u32 %v1791, 2147483648
    %v1806 = vmul.f32 %v1805, 1.442695
    %v1807 = vpow.pop %v1806
    %v1808 = vadd.f32 %v1807, 1.0
    %v1809 = vrcp.pop %v1808
    %v1810 = vmul.f32 1.0, %v1809
    %v1812 = vrot.slane %v1627, 6
    %v1814 = vmul.f32 %v1803, %v1812
    %v1815 = vmul.f32 %v1797, %v1804
    %v1816 = vadd.f32 %v1814, %v1815
    %v1817 = vtanh.pop %v1816
    %v1818 = vmul.f32 %v1810, %v1817
    %1819 = vst [vmem:[#allocation2 + $0x8] sm:$0xc0] %v1818
    %v1820 = vld [vmem:[#allocation2] sm:$0xff]
    %v1821 = vld [vmem:[#allocation2 + $0x8] sm:$0xff]
    %v1822 = vld [vmem:[#allocation9] sm:$0xff]
    %v1823 = vld [vmem:[#allocation9 + $0x8] sm:$0xff]
    %v1824 = vld [vmem:[#allocation9 + $0x10] sm:$0xff]
    %v1825 = vld [vmem:[#allocation9 + $0x18] sm:$0xff]
    %v1826 = vld [vmem:[#allocation9 + $0x20] sm:$0xff]
    %v1827 = vld [vmem:[#allocation9 + $0x28] sm:$0xff]
    %v1828 = vld [vmem:[#allocation9 + $0x30] sm:$0xff]
    %v1829 = vld [vmem:[#allocation9 + $0x38] sm:$0xff]
    %v1830 = vld [vmem:[#allocation9 + $0x40] sm:$0xff]
    %v1831 = vld [vmem:[#allocation9 + $0x48] sm:$0xff]
    %v1832 = vld [vmem:[#allocation9 + $0x50] sm:$0xff]
    %v1833 = vld [vmem:[#allocation9 + $0x58] sm:$0xff]
    %v1834 = vld [vmem:[#allocation9 + $0x60] sm:$0xff]
    %v1835 = vld [vmem:[#allocation9 + $0x68] sm:$0xff]
    %v1836 = vld [vmem:[#allocation9 + $0x70] sm:$0xff]
    %v1837 = vld [vmem:[#allocation9 + $0x78] sm:$0xff]
    %v1838 = vld [vmem:[%s5] sm:$0x1]
    %v1840 = vlaneseq
    %v1841 = vshrl.u32 %v1840, 7
    %v1842 = vsub.s32 0, %v1841
    %v1843 = vrot.slane %v1838, %v1842
    %1845 = vmatprep.subr.mxu0 0.0
    %1846 = vmatpush1.msra.mxu0 %v1822
    %1847 = vmatprep.subr.mxu0 0.0
    %1848 = vmatpush1.msra.mxu0 %v1823
    %1849 = vmatprep.subr.mxu0 0.0
    %1850 = vmatpush1.msra.mxu0 %v1824
    %1851 = vmatprep.subr.mxu0 0.0
    %1852 = vmatpush1.msra.mxu0 %v1825
    %1853 = vmatprep.subr.mxu0 0.0
    %1854 = vmatpush1.msra.mxu0 %v1826
    %1855 = vmatprep.subr.mxu0 0.0
    %1856 = vmatpush1.msra.mxu0 %v1827
    %1857 = vmatprep.subr.mxu0 0.0
    %1858 = vmatpush1.msra.mxu0 %v1828
    %1859 = vmatprep.subr.mxu0 0.0
    %1860 = vmatpush1.msra.mxu0 %v1829
    %1861 = vmatprep.subr.mxu0 0.0
    %1862 = vmatpush1.msra.mxu0 %v1830
    %1863 = vmatprep.subr.mxu0 0.0
    %1864 = vmatpush1.msra.mxu0 %v1831
    %1865 = vmatprep.subr.mxu0 0.0
    %1866 = vmatpush1.msra.mxu0 %v1832
    %1867 = vmatprep.subr.mxu0 0.0
    %1868 = vmatpush1.msra.mxu0 %v1833
    %1869 = vmatprep.subr.mxu0 0.0
    %1870 = vmatpush1.msra.mxu0 %v1834
    %1871 = vmatprep.subr.mxu0 0.0
    %1872 = vmatpush1.msra.mxu0 %v1835
    %1873 = vmatprep.subr.mxu0 0.0
    %1874 = vmatpush1.msra.mxu0 %v1836
    %1875 = vmatprep.subr.mxu0 0.0
    %1876 = vmatpush1.msra.mxu0 %v1837
    %1877 = vmatprep.subr.mxu0 0.0
    %1878 = vmatpush1.msra.mxu0 0.0
    %1879 = vmatprep.subr.mxu0 0.0
    %1880 = vmatpush1.msra.mxu0 0.0
    %1881 = vmatprep.subr.mxu0 0.0
    %1882 = vmatpush1.msra.mxu0 0.0
    %1883 = vmatprep.subr.mxu0 0.0
    %1884 = vmatpush1.msra.mxu0 0.0
    %1885 = vmatprep.subr.mxu0 0.0
    %1886 = vmatpush1.msra.mxu0 0.0
    %1887 = vmatprep.subr.mxu0 0.0
    %1888 = vmatpush1.msra.mxu0 0.0
    %1889 = vmatprep.subr.mxu0 0.0
    %1890 = vmatpush1.msra.mxu0 0.0
    %1891 = vmatprep.subr.mxu0 0.0
    %1892 = vmatpush1.msra.mxu0 0.0
    %1893 = vmatprep.subr.mxu0 0.0
    %1894 = vmatpush1.msra.mxu0 0.0
    %1895 = vmatprep.subr.mxu0 0.0
    %1896 = vmatpush1.msra.mxu0 0.0
    %1897 = vmatprep.subr.mxu0 0.0
    %1898 = vmatpush1.msra.mxu0 0.0
    %1899 = vmatprep.subr.mxu0 0.0
    %1900 = vmatpush1.msra.mxu0 0.0
    %1901 = vmatprep.subr.mxu0 0.0
    %1902 = vmatpush1.msra.mxu0 0.0
    %1903 = vmatprep.subr.mxu0 0.0
    %1904 = vmatpush1.msra.mxu0 0.0
    %1905 = vmatprep.subr.mxu0 0.0
    %1906 = vmatpush1.msra.mxu0 0.0
    %1907 = vmatprep.subr.mxu0 0.0
    %1908 = vmatpush1.msra.mxu0 0.0
    %1909 = vmatprep.mubr.f32.mxu0 0.0
    %1910 = vmatmul.mubr.f32.gmra.mrb[0].mxu0 %v1820
    %v1911 = vpop.f32.mrb[0].mxu0
    %v1912 = vadd.f32 %v1843, %v1911
    %v1913 = vpop.f32.mrb[0].mxu0
    %1914 = vmatprep.mubr.f32.mxu0 0.0
    %1915 = vmatmul.mubr.f32.gmra.mrb[0].mxu0 %v1821
    %v1916 = vpop.f32.mrb[0].mxu0
    %v1917 = vadd.f32 %v1843, %v1916
    %v1918 = vpop.f32.mrb[0].mxu0
    %1919 = vdwg.mxu0
    %1920 = vst [vmem:[#allocation11] sm:$0xff] %v1912
    %1921 = vst [vmem:[#allocation11 + $0x8] sm:$0xff] %v1917
    // Predicated region
    $region42: #{tpu_custom_call.1} parent=1 // pred_check
      _
    $region43: #{tpu_custom_call.1} parent=1 // pred_check_branch
      %1923 = sbr.rel (0) target = $region45
    $region44: #{tpu_custom_call.1} parent=1 // pred_region
      %s1925 = ssub.s32 256, 256
      %1926 = vsyncadd [#allocation5], %s1925
      %s1927 = sshll.u32 [#allocation11], 4
      %s1928 = int_to_ptr.vmem [resolvable:$true] %s1927
      %1933 = dma.vmem_to_hbm [thread:$0]  %s1928, 256, %s6, [#allocation5], 128, 128, 8
    $region45: #{tpu_custom_call.1} parent=1 // pred_fallthru
      _
    // Predicated region
    $region46: #{tpu_custom_call.1} parent=1 // pred_check
      _
    $region47: #{tpu_custom_call.1} parent=1 // pred_check_branch
      %1935 = sbr.rel (0) target = $region49
    $region48: #{tpu_custom_call.1} parent=1 // pred_region
      %1936 = dma.done [#allocation5], 256
    $region49: #{tpu_custom_call.1} parent=1 // pred_fallthru
      _
    %1937 = vsyncpa [#allocation4], 1
    %1938 = vsyncpa [#allocation7], 1
    %1939 = vsyncpa [#allocation10], 1
    %1940 = vsyncpa [#allocation5], 1

</llo_original>
